<compile_context>
chip_gen: v5e
topology: v5e:2x2
jax: 0.10.0
libtpu: 0.0.40
codegen_flags: <defaults>
</compile_context>

<pallas_src>
import functools

import jax
import jax.numpy as jnp
import numpy as np
from jax import lax
from jax.experimental import pallas as pl
from jax.experimental.pallas import tpu as pltpu

NUM_CORES = 2      # leading "parallel" grid axis (v7x: 2 TCs; harmless on v5e/v6e)
LANES = 128


def _round_up(x, m):
    return ((x + m - 1) // m) * m


def _cdiv(a, b):
    return (a + b - 1) // b


def _first_argmax_onehot(a, iota):
    """One-hot of the first maximal index along the last axis (torch.argmax-like)."""
    d = a.shape[-1]
    amax = jnp.max(a, axis=-1, keepdims=True)
    idx = jnp.min(jnp.where(a == amax, iota, d), axis=-1, keepdims=True)
    return (iota == idx).astype(jnp.float32)


# ----------------------------------------------------------------------------
# Fused kernel: lane-packed edge masked-CE (every grid step) + node masked-CE
# + AtomWeightMetric numerator (once, on core 0).
# ----------------------------------------------------------------------------
def _fused_loss_kernel(pe_ref, te_ref, b_ref, px_ref, tx_ref, w_ref,
                       ce_e_ref, cnt_e_ref, ce_x_ref, cnt_x_ref, wsum_ref,
                       *, grp, rows_valid, tile, steps):
    c = pl.program_id(0)
    i = pl.program_id(1)

    @pl.when(i == 0)
    def _init():
        ce_e_ref[...] = jnp.zeros_like(ce_e_ref)
        cnt_e_ref[...] = jnp.zeros_like(cnt_e_ref)
        ce_x_ref[...] = jnp.zeros_like(ce_x_ref)
        cnt_x_ref[...] = jnp.zeros_like(cnt_x_ref)
        wsum_ref[...] = jnp.zeros_like(wsum_ref)

    # ------------- node pass: CE + AtomWeightMetric (once, core 0) ----------
    @pl.when((c == 0) & (i == 0))
    def _node():
        x = px_ref[...].astype(jnp.float32)            # (bs, n, dx)
        y = tx_ref[...].astype(jnp.float32)            # (bs, n, dx)
        w = w_ref[...].astype(jnp.float32)             # (1, 1, dx)
        iota = lax.broadcasted_iota(jnp.int32, x.shape, 2)
        oh_x = _first_argmax_onehot(x, iota)           # argmax(pred) one-hot
        oh_y = _first_argmax_onehot(y, iota)           # argmax(true) one-hot
        # AtomWeightMetric numerator: sum_b | sum_n w[argmax x] - sum_n w[argmax y] |
        per_node = jnp.sum((oh_x - oh_y) * w, axis=-1, keepdims=True)
        per_batch = jnp.sum(per_node, axis=1, keepdims=True)
        wsum_ref[...] += jnp.sum(jnp.abs(per_batch))
        # Masked cross entropy (argmax target; rows with all-zero true skipped).
        maskx = jnp.any(y != 0.0, axis=-1, keepdims=True)
        logit = jnp.sum(x * oh_y, axis=-1, keepdims=True)
        mx = jnp.max(x, axis=-1, keepdims=True)
        lse = mx + jnp.log(jnp.sum(jnp.exp(x - mx), axis=-1, keepdims=True))
        cex = jnp.where(maskx, lse - logit, 0.0)
        ce_x_ref[...] += jnp.sum(cex)
        cnt_x_ref[...] += jnp.sum(maskx.astype(jnp.float32))

    # ------------- edge pass: lane-packed masked cross entropy --------------
    p = pe_ref[...].astype(jnp.float32)                # (tile, 128)
    t = te_ref[...].astype(jnp.float32)                # (tile, 128)

    lane_grp = lax.broadcasted_iota(jnp.int32, (1, LANES), 1) % grp

    # Segmented max within each `grp`-lane group (masked roll butterfly, XLU).
    m = p
    s = 1
    while s < grp:
        fwd = pltpu.roll(m, shift=LANES - s, axis=1)   # value from lane l+s
        bwd = pltpu.roll(m, shift=s, axis=1)           # value from lane l-s
        m = jnp.maximum(m, jnp.where(lane_grp < grp - s, fwd, -jnp.inf))
        m = jnp.maximum(m, jnp.where(lane_grp >= s, bwd, -jnp.inf))
        s *= 2

    e = jnp.exp(p - m)

    # Segmented sum of e (exact f32): inclusive prefix + inclusive suffix - e.
    pre = e
    suf = e
    s = 1
    while s < grp:
        pre = pre + jnp.where(lane_grp >= s,
                              pltpu.roll(pre, shift=s, axis=1), 0.0)
        suf = suf + jnp.where(lane_grp < grp - s,
                              pltpu.roll(suf, shift=LANES - s, axis=1), 0.0)
        s *= 2
    sum_e = pre + suf - e                              # per-group sumexp, broadcast

    # Per-group nonzero count of the target, broadcast — on the idle MXU
    # (0/1 values: exact in bf16 with f32 accumulation).
    ind = jnp.where(t != 0.0, 1.0, 0.0).astype(jnp.bfloat16)
    nz = jnp.dot(ind, b_ref[...], preferred_element_type=jnp.float32)

    # Tail / duplicate-block masking from the *unclamped* packed-row index.
    r0 = (c * steps + i) * tile
    ridx = r0 + lax.broadcasted_iota(jnp.int32, (tile, 1), 0)   # (tile, 1)
    mask = (nz > 0.5) & (ridx < rows_valid)                     # (tile, 128)

    inv_g = 1.0 / grp
    # Each unmasked group contributes (m_g + log s_g) once (split 1/grp over its
    # lanes) minus its target logit (t is one-hot so p*t hits exactly one lane).
    ce = jnp.where(mask, (m + jnp.log(sum_e)) * inv_g - p * t, 0.0)
    cnt = jnp.where(mask, inv_g, 0.0)

    if tile == 8:
        ce_e_ref[...] += ce
        cnt_e_ref[...] += cnt
    elif tile % 8 == 0:
        ce_e_ref[...] += jnp.sum(ce.reshape(-1, 8, LANES), axis=0)
        cnt_e_ref[...] += jnp.sum(cnt.reshape(-1, 8, LANES), axis=0)
    else:
        # Rare fallback (tile not a multiple of 8): scalar broadcast, pre-scaled
        # so the wrapper's full-block sum stays correct.
        scale = 1.0 / (8 * LANES)
        ce_e_ref[...] += jnp.sum(ce) * scale
        cnt_e_ref[...] += jnp.sum(cnt) * scale


# ----------------------------------------------------------------------------
# Wrapper: pack edges, build block-diagonal ones, launch the single fused call.
# ----------------------------------------------------------------------------
def _pack_edges(pred_e, true_e):
    """(bs,n,n,de) -> (R/g, 128) with g = 128//grp groups of grp classes per row."""
    de = pred_e.shape[-1]
    if de > LANES:
        raise NotImplementedError("TODO(synk): de > 128 needs a multi-row group scheme")
    pe = pred_e.reshape(-1, de).astype(jnp.float32)
    te = true_e.reshape(-1, de).astype(jnp.float32)
    grp = de
    if LANES % grp != 0:
        # Pad classes up to the next power of two (divisor of 128).  Pred pads with a
        # large negative so exp()->0 and max is unaffected; true pads with 0.
        g2 = 1
        while g2 < grp:
            g2 *= 2
        pe = jnp.pad(pe, ((0, 0), (0, g2 - grp)), constant_values=-1e30)
        te = jnp.pad(te, ((0, 0), (0, g2 - grp)), constant_values=0.0)
        grp = g2
    per_row = LANES // grp
    r = pe.shape[0]
    if r % per_row != 0:
        padr = per_row - r % per_row   # zero rows -> CE-masked (t == 0 everywhere)
        pe = jnp.pad(pe, ((0, padr), (0, 0)))
        te = jnp.pad(te, ((0, padr), (0, 0)))
        r += padr
    return pe.reshape(r // per_row, LANES), te.reshape(r // per_row, LANES), grp


def train_loss_discrete(lambda_train, weight_check,
                        masked_pred_X, masked_pred_E, pred_y,
                        true_X, true_E, true_y, node_mask, log=False,
                        tile_rows=1024):
    del pred_y, true_y, node_mask, log          # unused by the returned loss
    bs, n, dx = true_X.shape

    pe, te, grp = _pack_edges(masked_pred_E, true_E)
    rp = pe.shape[0]                            # valid packed rows

    if rp % 8 == 0:
        tile = min(tile_rows, rp)
    elif rp > 8:
        tile = min(tile_rows, _round_up(rp, 8))
    else:
        tile = rp                               # full-dim block
    nblocks = _cdiv(rp, tile)
    steps = _cdiv(nblocks, NUM_CORES)

    # Block-diagonal ones for the per-group MXU sum (exact in bf16 for 0/1 data).
    gidx = jnp.arange(LANES, dtype=jnp.int32) // grp
    bones = (gidx[:, None] == gidx[None, :]).astype(jnp.bfloat16)

    px = masked_pred_X.astype(jnp.float32)
    tx = true_X.astype(jnp.float32)
    w3 = weight_check.reshape(1, 1, dx).astype(jnp.float32)

    kernel = functools.partial(_fused_loss_kernel, grp=grp, rows_valid=rp,
                               tile=tile, steps=steps)

    def e_map(c, i):
        # Clamp so every DMA stays in bounds; duplicate / tail blocks are fully
        # masked in-kernel via the unclamped packed-row index.
        return (jnp.minimum(c * steps + i, nblocks - 1), 0)

    acc_shape = jax.ShapeDtypeStruct((NUM_CORES * 8, LANES), jnp.float32)
    ce_e, cnt_e, ce_x, cnt_x, w_abs = pl.pallas_call(
        kernel,
        out_shape=(acc_shape,) * 5,
        grid_spec=pltpu.PrefetchScalarGridSpec(
            num_scalar_prefetch=0,
            grid=(NUM_CORES, steps),
            in_specs=[
                pl.BlockSpec((tile, LANES), e_map),                      # pred_E packed
                pl.BlockSpec((tile, LANES), e_map),                      # true_E packed
                pl.BlockSpec((LANES, LANES), lambda c, i: (0, 0)),       # block-diag ones
                pl.BlockSpec((bs, n, dx), lambda c, i: (0, 0, 0)),       # pred_X (full)
                pl.BlockSpec((bs, n, dx), lambda c, i: (0, 0, 0)),       # true_X (full)
                pl.BlockSpec((1, 1, dx), lambda c, i: (0, 0, 0)),        # weight_check
            ],
            out_specs=[pl.BlockSpec((8, LANES), lambda c, i: (c, 0))] * 5),
        compiler_params=pltpu.CompilerParams(
            dimension_semantics=("parallel", "arbitrary")),
    )(pe, te, bones, px, tx, w3)

    loss_X = ce_x[0, 0] / cnt_x[0, 0]       # NaN if every row masked (matches torch)
    loss_E = jnp.sum(ce_e) / jnp.sum(cnt_e)
    loss_w = w_abs[0, 0] / bs
    return lambda_train[0] * loss_X + lambda_train[1] * loss_E + loss_w


# ----------------------------------------------------------------------------
# Pure-JAX reference for verification
# ----------------------------------------------------------------------------
def reference_loss(lambda_train, weight_check,
                   masked_pred_X, masked_pred_E, true_X, true_E):
    bs = true_X.shape[0]
    pw = weight_check[jnp.argmax(masked_pred_X, -1)].sum(-1)
    rw = weight_check[jnp.argmax(true_X, -1)].sum(-1)
    loss_w = jnp.abs(pw - rw).sum() / bs

    def masked_ce(pred, true):
        pred = pred.reshape(-1, pred.shape[-1])
        true = true.reshape(-1, true.shape[-1])
        mask = jnp.any(true != 0.0, axis=-1)
        tgt = jnp.argmax(true, axis=-1)
        lse = jax.scipy.special.logsumexp(pred, axis=-1)
        picked = jnp.take_along_axis(pred, tgt[:, None], axis=-1)[:, 0]
        ce = lse - picked
        return jnp.sum(jnp.where(mask, ce, 0.0)) / jnp.sum(mask)

    return (lambda_train[0] * masked_ce(masked_pred_X, true_X)
            + lambda_train[1] * masked_ce(masked_pred_E, true_E)
            + loss_w)


if __name__ == "__main__":
    bs, n, dx, de = 2, 8, 16, 8
    lambda_train = (1.0, 5.0)

    # Deterministic "atomic weight" table of length dx (synthetic, in-script).
    weight_check = jnp.array(
        [0.0, 12.011, 14.007, 15.999, 18.998, 30.974, 32.06, 35.45,
         79.904, 126.904, 10.811, 28.086, 74.922, 78.971, 118.71, 207.2],
        dtype=jnp.float32)

    key = jax.random.PRNGKey(0)
    k1, k2, k3, k4, k5, k6, k7 = jax.random.split(key, 7)

    masked_pred_X = jax.random.normal(k1, (bs, n, dx), dtype=jnp.float32)
    masked_pred_E = jax.random.normal(k2, (bs, n, n, de), dtype=jnp.float32)

    # one-hot node targets
    x_cls = jax.random.randint(k3, (bs, n), 0, dx)
    true_X = jax.nn.one_hot(x_cls, dx, dtype=jnp.float32)

    # one-hot edge targets with ~25% of rows zeroed (exercises the mask)
    e_cls = jax.random.randint(k4, (bs, n, n), 0, de)
    true_E = jax.nn.one_hot(e_cls, de, dtype=jnp.float32)
    keep = (jax.random.uniform(k5, (bs, n, n)) > 0.25).astype(jnp.float32)
    true_E = true_E * keep[..., None]

    pred_y = jax.random.normal(k6, (bs,), dtype=jnp.float32)
    true_y = jax.random.normal(k7, (bs,), dtype=jnp.float32)
    node_mask = jnp.ones((bs, n), dtype=bool)

    loss = train_loss_discrete(lambda_train, weight_check,
                               masked_pred_X, masked_pred_E, pred_y,
                               true_X, true_E, true_y, node_mask, log=False)
    loss = jax.block_until_ready(loss)

    ref = reference_loss(lambda_train, weight_check,
                         masked_pred_X, masked_pred_E, true_X, true_E)
    ref = jax.block_until_ready(ref)

    np.testing.assert_allclose(np.asarray(loss), np.asarray(ref),
                               rtol=1e-5, atol=1e-5)
    print("KERNEL_OK")
</pallas_src>

<mosaic_0001>
module attributes {stable_mosaic.version = 11 : i64} {
  func.func @_fused_loss_kernel(%arg0: i32, %arg1: i32, %arg2: memref<8x128xf32, #tpu.memory_space<vmem>>, %arg3: memref<8x128xf32, #tpu.memory_space<vmem>>, %arg4: memref<128x128xbf16, #tpu.memory_space<vmem>>, %arg5: memref<2x8x16xf32, #tpu.memory_space<vmem>>, %arg6: memref<2x8x16xf32, #tpu.memory_space<vmem>>, %arg7: memref<1x1x16xf32, #tpu.memory_space<vmem>>, %arg8: memref<8x128xf32, #tpu.memory_space<vmem>>, %arg9: memref<8x128xf32, #tpu.memory_space<vmem>>, %arg10: memref<8x128xf32, #tpu.memory_space<vmem>>, %arg11: memref<8x128xf32, #tpu.memory_space<vmem>>, %arg12: memref<8x128xf32, #tpu.memory_space<vmem>>) attributes {dimension_semantics = [#tpu.dimension_semantics<parallel>, #tpu.dimension_semantics<arbitrary>], iteration_bounds = array<i64: 2, 1>, scalar_prefetch = 0 : i64, scratch_operands = 0 : i64, tpu.core_type = #tpu.core_type<tc>, window_params = [{transform_indices = @transform_0, window_bounds = array<i64: 8, 128>}, {transform_indices = @transform_1, window_bounds = array<i64: 8, 128>}, {pipeline_mode = #tpu.pipeline_mode<synchronous>, transform_indices = @transform_2, window_bounds = array<i64: 128, 128>}, {pipeline_mode = #tpu.pipeline_mode<synchronous>, transform_indices = @transform_3, window_bounds = array<i64: 2, 8, 16>}, {pipeline_mode = #tpu.pipeline_mode<synchronous>, transform_indices = @transform_4, window_bounds = array<i64: 2, 8, 16>}, {pipeline_mode = #tpu.pipeline_mode<synchronous>, transform_indices = @transform_5, window_bounds = array<i64: 1, 1, 16>}, {transform_indices = @transform_6, window_bounds = array<i64: 8, 128>}, {transform_indices = @transform_7, window_bounds = array<i64: 8, 128>}, {transform_indices = @transform_8, window_bounds = array<i64: 8, 128>}, {transform_indices = @transform_9, window_bounds = array<i64: 8, 128>}, {transform_indices = @transform_10, window_bounds = array<i64: 8, 128>}]} {
    %c0_i32 = arith.constant 0 : i32
    %0 = arith.cmpi eq, %arg1, %c0_i32 : i32
    %1 = arith.extui %0 : i1 to i32
    %c0_i32_0 = arith.constant 0 : i32
    %2 = arith.cmpi ne, %1, %c0_i32_0 : i32
    scf.if %2 {
      %cst_61 = arith.constant 0.000000e+00 : f32
      %164 = vector.broadcast %cst_61 : f32 to vector<8x128xf32>
      %c0_62 = arith.constant 0 : index
      %c0_63 = arith.constant 0 : index
      %165 = vector.load %arg8[%c0_62, %c0_63] : memref<8x128xf32, #tpu.memory_space<vmem>>, vector<8x128xf32>
      tpu.vector_store %arg8[%c0_62, %c0_63], %164 {strides = array<i32>} : memref<8x128xf32, #tpu.memory_space<vmem>>, vector<8x128xf32>,
      %cst_64 = arith.constant 0.000000e+00 : f32
      %166 = vector.broadcast %cst_64 : f32 to vector<8x128xf32>
      %c0_65 = arith.constant 0 : index
      %c0_66 = arith.constant 0 : index
      %167 = vector.load %arg9[%c0_65, %c0_66] : memref<8x128xf32, #tpu.memory_space<vmem>>, vector<8x128xf32>
      tpu.vector_store %arg9[%c0_65, %c0_66], %166 {strides = array<i32>} : memref<8x128xf32, #tpu.memory_space<vmem>>, vector<8x128xf32>,
      %cst_67 = arith.constant 0.000000e+00 : f32
      %168 = vector.broadcast %cst_67 : f32 to vector<8x128xf32>
      %c0_68 = arith.constant 0 : index
      %c0_69 = arith.constant 0 : index
      %169 = vector.load %arg10[%c0_68, %c0_69] : memref<8x128xf32, #tpu.memory_space<vmem>>, vector<8x128xf32>
      tpu.vector_store %arg10[%c0_68, %c0_69], %168 {strides = array<i32>} : memref<8x128xf32, #tpu.memory_space<vmem>>, vector<8x128xf32>,
      %cst_70 = arith.constant 0.000000e+00 : f32
      %170 = vector.broadcast %cst_70 : f32 to vector<8x128xf32>
      %c0_71 = arith.constant 0 : index
      %c0_72 = arith.constant 0 : index
      %171 = vector.load %arg11[%c0_71, %c0_72] : memref<8x128xf32, #tpu.memory_space<vmem>>, vector<8x128xf32>
      tpu.vector_store %arg11[%c0_71, %c0_72], %170 {strides = array<i32>} : memref<8x128xf32, #tpu.memory_space<vmem>>, vector<8x128xf32>,
      %cst_73 = arith.constant 0.000000e+00 : f32
      %172 = vector.broadcast %cst_73 : f32 to vector<8x128xf32>
      %c0_74 = arith.constant 0 : index
      %c0_75 = arith.constant 0 : index
      %173 = vector.load %arg12[%c0_74, %c0_75] : memref<8x128xf32, #tpu.memory_space<vmem>>, vector<8x128xf32>
      tpu.vector_store %arg12[%c0_74, %c0_75], %172 {strides = array<i32>} : memref<8x128xf32, #tpu.memory_space<vmem>>, vector<8x128xf32>,
    } else {
    }
    %c0_i32_1 = arith.constant 0 : i32
    %3 = arith.cmpi eq, %arg0, %c0_i32_1 : i32
    %c0_i32_2 = arith.constant 0 : i32
    %4 = arith.cmpi eq, %arg1, %c0_i32_2 : i32
    %5 = arith.andi %3, %4 : i1
    %6 = arith.extui %5 : i1 to i32
    %c0_i32_3 = arith.constant 0 : i32
    %7 = arith.cmpi ne, %6, %c0_i32_3 : i32
    scf.if %7 {
      %c0_61 = arith.constant 0 : index
      %c0_62 = arith.constant 0 : index
      %c0_63 = arith.constant 0 : index
      %164 = vector.load %arg5[%c0_61, %c0_62, %c0_63] : memref<2x8x16xf32, #tpu.memory_space<vmem>>, vector<2x8x16xf32>
      %c0_64 = arith.constant 0 : index
      %c0_65 = arith.constant 0 : index
      %c0_66 = arith.constant 0 : index
      %165 = vector.load %arg6[%c0_64, %c0_65, %c0_66] : memref<2x8x16xf32, #tpu.memory_space<vmem>>, vector<2x8x16xf32>
      %c0_67 = arith.constant 0 : index
      %c0_68 = arith.constant 0 : index
      %c0_69 = arith.constant 0 : index
      %166 = vector.load %arg7[%c0_67, %c0_68, %c0_69] : memref<1x1x16xf32, #tpu.memory_space<vmem>>, vector<1x1x16xf32>
      %167 = tpu.iota {dimensions = array<i32: 2>} : vector<2x8x16xi32>
      %cst_70 = arith.constant dense<0xFF800000> : vector<2x8xf32>
      %168 = vector.multi_reduction <maximumf>, %164, %cst_70 [2] : vector<2x8x16xf32> to vector<2x8xf32>
      %169 = vector.shape_cast %168 : vector<2x8xf32> to vector<2x8x1xf32>
      %170 = vector.broadcast %169 : vector<2x8x1xf32> to vector<2x8x16xf32>
      %171 = arith.cmpf oeq, %164, %170 : vector<2x8x16xf32>
      %c16_i32 = arith.constant 16 : i32
      %172 = vector.broadcast %c16_i32 : i32 to vector<2x8x16xi32>
      %173 = arith.select %171, %167, %172 : vector<2x8x16xi1>, vector<2x8x16xi32>
      %cst_71 = arith.constant dense<2147483647> : vector<2x8xi32>
      %174 = vector.multi_reduction <minsi>, %173, %cst_71 [2] : vector<2x8x16xi32> to vector<2x8xi32>
      %175 = vector.shape_cast %174 : vector<2x8xi32> to vector<2x8x1xi32>
      %176 = vector.broadcast %175 : vector<2x8x1xi32> to vector<2x8x16xi32>
      %177 = arith.cmpi eq, %167, %176 : vector<2x8x16xi32>
      %178 = arith.extui %177 : vector<2x8x16xi1> to vector<2x8x16xi32>
      %179 = arith.sitofp %178 : vector<2x8x16xi32> to vector<2x8x16xf32>
      %cst_72 = arith.constant dense<0xFF800000> : vector<2x8xf32>
      %180 = vector.multi_reduction <maximumf>, %165, %cst_72 [2] : vector<2x8x16xf32> to vector<2x8xf32>
      %181 = vector.shape_cast %180 : vector<2x8xf32> to vector<2x8x1xf32>
      %182 = vector.broadcast %181 : vector<2x8x1xf32> to vector<2x8x16xf32>
      %183 = arith.cmpf oeq, %165, %182 : vector<2x8x16xf32>
      %c16_i32_73 = arith.constant 16 : i32
      %184 = vector.broadcast %c16_i32_73 : i32 to vector<2x8x16xi32>
      %185 = arith.select %183, %167, %184 : vector<2x8x16xi1>, vector<2x8x16xi32>
      %cst_74 = arith.constant dense<2147483647> : vector<2x8xi32>
      %186 = vector.multi_reduction <minsi>, %185, %cst_74 [2] : vector<2x8x16xi32> to vector<2x8xi32>
      %187 = vector.shape_cast %186 : vector<2x8xi32> to vector<2x8x1xi32>
      %188 = vector.broadcast %187 : vector<2x8x1xi32> to vector<2x8x16xi32>
      %189 = arith.cmpi eq, %167, %188 : vector<2x8x16xi32>
      %190 = arith.extui %189 : vector<2x8x16xi1> to vector<2x8x16xi32>
      %191 = arith.sitofp %190 : vector<2x8x16xi32> to vector<2x8x16xf32>
      %192 = arith.subf %179, %191 : vector<2x8x16xf32>
      %193 = vector.broadcast %166 : vector<1x1x16xf32> to vector<2x8x16xf32>
      %194 = arith.mulf %192, %193 : vector<2x8x16xf32>
      %cst_75 = arith.constant dense<0.000000e+00> : vector<2x8xf32>
      %195 = vector.multi_reduction <add>, %194, %cst_75 [2] : vector<2x8x16xf32> to vector<2x8xf32>
      %196 = vector.shape_cast %195 : vector<2x8xf32> to vector<2x8x1xf32>
      %cst_76 = arith.constant dense<0.000000e+00> : vector<2x1xf32>
      %197 = vector.multi_reduction <add>, %196, %cst_76 [1] : vector<2x8x1xf32> to vector<2x1xf32>
      %198 = vector.shape_cast %197 : vector<2x1xf32> to vector<2x1x1xf32>
      %c0_77 = arith.constant 0 : index
      %c0_78 = arith.constant 0 : index
      %199 = vector.load %arg12[%c0_77, %c0_78] : memref<8x128xf32, #tpu.memory_space<vmem>>, vector<8x128xf32>
      %200 = math.absf %198 : vector<2x1x1xf32>
      %201 = vector.shape_cast %200 : vector<2x1x1xf32> to vector<1x2x1x1xf32>
      %cst_79 = arith.constant dense<0.000000e+00> : vector<1xf32>
      %202 = vector.multi_reduction <add>, %201, %cst_79 [1, 2, 3] : vector<1x2x1x1xf32> to vector<1xf32>
      %203 = vector.shape_cast %202 : vector<1xf32> to vector<1x1x1x1xf32>
      %204 = vector.extract %203[0, 0, 0, 0] : f32 from vector<1x1x1x1xf32>
      %205 = vector.broadcast %204 : f32 to vector<8x128xf32>
      %206 = arith.addf %199, %205 : vector<8x128xf32>
      %c0_80 = arith.constant 0 : index
      %c0_81 = arith.constant 0 : index
      %207 = vector.load %arg12[%c0_80, %c0_81] : memref<8x128xf32, #tpu.memory_space<vmem>>, vector<8x128xf32>
      tpu.vector_store %arg12[%c0_80, %c0_81], %206 {strides = array<i32>} : memref<8x128xf32, #tpu.memory_space<vmem>>, vector<8x128xf32>,
      %cst_82 = arith.constant 0.000000e+00 : f32
      %208 = vector.broadcast %cst_82 : f32 to vector<2x8x16xf32>
      %209 = arith.cmpf one, %165, %208 : vector<2x8x16xf32>
      %cst_83 = arith.constant 1.000000e+00 : f32
      %cst_84 = arith.constant 0.000000e+00 : f32
      %210 = vector.broadcast %cst_83 : f32 to vector<2x8x16xf32>
      %211 = vector.broadcast %cst_84 : f32 to vector<2x8x16xf32>
      %212 = arith.select %209, %210, %211 : vector<2x8x16xi1>, vector<2x8x16xf32>
      %cst_85 = arith.constant dense<0xFF800000> : vector<2x8xf32>
      %213 = vector.multi_reduction <maximumf>, %212, %cst_85 [2] : vector<2x8x16xf32> to vector<2x8xf32>
      %cst_86 = arith.constant 0.000000e+00 : f32
      %214 = vector.broadcast %cst_86 : f32 to vector<2x8xf32>
      %215 = arith.cmpf ogt, %213, %214 : vector<2x8xf32>
      %216 = vector.shape_cast %215 : vector<2x8xi1> to vector<2x8x1xi1>
      %217 = arith.mulf %164, %191 : vector<2x8x16xf32>
      %cst_87 = arith.constant dense<0.000000e+00> : vector<2x8xf32>
      %218 = vector.multi_reduction <add>, %217, %cst_87 [2] : vector<2x8x16xf32> to vector<2x8xf32>
      %219 = vector.shape_cast %218 : vector<2x8xf32> to vector<2x8x1xf32>
      %cst_88 = arith.constant dense<0xFF800000> : vector<2x8xf32>
      %220 = vector.multi_reduction <maximumf>, %164, %cst_88 [2] : vector<2x8x16xf32> to vector<2x8xf32>
      %221 = vector.shape_cast %220 : vector<2x8xf32> to vector<2x8x1xf32>
      %222 = vector.broadcast %221 : vector<2x8x1xf32> to vector<2x8x16xf32>
      %223 = arith.subf %164, %222 : vector<2x8x16xf32>
      %224 = math.exp %223 : vector<2x8x16xf32>
      %cst_89 = arith.constant dense<0.000000e+00> : vector<2x8xf32>
      %225 = vector.multi_reduction <add>, %224, %cst_89 [2] : vector<2x8x16xf32> to vector<2x8xf32>
      %226 = vector.shape_cast %225 : vector<2x8xf32> to vector<2x8x1xf32>
      %227 = math.log %226 : vector<2x8x1xf32>
      %228 = arith.addf %221, %227 : vector<2x8x1xf32>
      %229 = arith.subf %228, %219 : vector<2x8x1xf32>
      %cst_90 = arith.constant 0.000000e+00 : f32
      %230 = vector.broadcast %cst_90 : f32 to vector<2x8x1xf32>
      %231 = arith.select %216, %229, %230 : vector<2x8x1xi1>, vector<2x8x1xf32>
      %c0_91 = arith.constant 0 : index
      %c0_92 = arith.constant 0 : index
      %232 = vector.load %arg10[%c0_91, %c0_92] : memref<8x128xf32, #tpu.memory_space<vmem>>, vector<8x128xf32>
      %233 = vector.shape_cast %231 : vector<2x8x1xf32> to vector<1x2x8x1xf32>
      %cst_93 = arith.constant dense<0.000000e+00> : vector<1xf32>
      %234 = vector.multi_reduction <add>, %233, %cst_93 [1, 2, 3] : vector<1x2x8x1xf32> to vector<1xf32>
      %235 = vector.shape_cast %234 : vector<1xf32> to vector<1x1x1x1xf32>
      %236 = vector.extract %235[0, 0, 0, 0] : f32 from vector<1x1x1x1xf32>
      %237 = vector.broadcast %236 : f32 to vector<8x128xf32>
      %238 = arith.addf %232, %237 : vector<8x128xf32>
      %c0_94 = arith.constant 0 : index
      %c0_95 = arith.constant 0 : index
      %239 = vector.load %arg10[%c0_94, %c0_95] : memref<8x128xf32, #tpu.memory_space<vmem>>, vector<8x128xf32>
      tpu.vector_store %arg10[%c0_94, %c0_95], %238 {strides = array<i32>} : memref<8x128xf32, #tpu.memory_space<vmem>>, vector<8x128xf32>,
      %c0_96 = arith.constant 0 : index
      %c0_97 = arith.constant 0 : index
      %240 = vector.load %arg11[%c0_96, %c0_97] : memref<8x128xf32, #tpu.memory_space<vmem>>, vector<8x128xf32>
      %241 = arith.extui %216 : vector<2x8x1xi1> to vector<2x8x1xi32>
      %242 = arith.sitofp %241 : vector<2x8x1xi32> to vector<2x8x1xf32>
      %243 = vector.shape_cast %242 : vector<2x8x1xf32> to vector<1x2x8x1xf32>
      %cst_98 = arith.constant dense<0.000000e+00> : vector<1xf32>
      %244 = vector.multi_reduction <add>, %243, %cst_98 [1, 2, 3] : vector<1x2x8x1xf32> to vector<1xf32>
      %245 = vector.shape_cast %244 : vector<1xf32> to vector<1x1x1x1xf32>
      %246 = vector.extract %245[0, 0, 0, 0] : f32 from vector<1x1x1x1xf32>
      %247 = vector.broadcast %246 : f32 to vector<8x128xf32>
      %248 = arith.addf %240, %247 : vector<8x128xf32>
      %c0_99 = arith.constant 0 : index
      %c0_100 = arith.constant 0 : index
      %249 = vector.load %arg11[%c0_99, %c0_100] : memref<8x128xf32, #tpu.memory_space<vmem>>, vector<8x128xf32>
      tpu.vector_store %arg11[%c0_99, %c0_100], %248 {strides = array<i32>} : memref<8x128xf32, #tpu.memory_space<vmem>>, vector<8x128xf32>,
    } else {
    }
    %c0 = arith.constant 0 : index
    %c0_4 = arith.constant 0 : index
    %8 = vector.load %arg2[%c0, %c0_4] : memref<8x128xf32, #tpu.memory_space<vmem>>, vector<8x128xf32>
    %c0_5 = arith.constant 0 : index
    %c0_6 = arith.constant 0 : index
    %9 = vector.load %arg3[%c0_5, %c0_6] : memref<8x128xf32, #tpu.memory_space<vmem>>, vector<8x128xf32>
    %10 = tpu.iota {dimensions = array<i32: 1>} : vector<1x128xi32>
    %c8_i32 = arith.constant 8 : i32
    %c0_i32_7 = arith.constant 0 : i32
    %11 = arith.cmpi eq, %c8_i32, %c0_i32_7 : i32
    %c1_i32 = arith.constant 1 : i32
    %12 = arith.select %11, %c1_i32, %c8_i32 : i32
    %13 = vector.broadcast %12 : i32 to vector<1x128xi32>
    %14 = arith.remsi %10, %13 : vector<1x128xi32>
    %c0_i32_8 = arith.constant 0 : i32
    %15 = vector.broadcast %c0_i32_8 : i32 to vector<1x128xi32>
    %16 = arith.cmpi ne, %14, %15 : vector<1x128xi32>
    %c0_i32_9 = arith.constant 0 : i32
    %17 = vector.broadcast %c0_i32_9 : i32 to vector<1x128xi32>
    %18 = arith.cmpi slt, %14, %17 : vector<1x128xi32>
    %c0_i32_10 = arith.constant 0 : i32
    %19 = arith.cmpi slt, %12, %c0_i32_10 : i32
    %20 = vector.broadcast %19 : i1 to vector<1x128xi1>
    %21 = vector.broadcast %20 : vector<1x128xi1> to vector<1x128xi1>
    %22 = arith.xori %18, %21 : vector<1x128xi1>
    %23 = arith.andi %22, %16 : vector<1x128xi1>
    %24 = vector.broadcast %12 : i32 to vector<1x128xi32>
    %25 = arith.addi %14, %24 : vector<1x128xi32>
    %26 = arith.select %23, %25, %14 : vector<1x128xi1>, vector<1x128xi32>
    %c127_i32 = arith.constant 127 : i32
    %27 = tpu.dynamic_rotate %8 by %c127_i32 dim 1 : vector<8x128xf32>, i32 -> vector<8x128xf32>
    %c1_i32_11 = arith.constant 1 : i32
    %28 = tpu.dynamic_rotate %8 by %c1_i32_11 dim 1 : vector<8x128xf32>, i32 -> vector<8x128xf32>
    %c7_i32 = arith.constant 7 : i32
    %29 = vector.broadcast %c7_i32 : i32 to vector<1x128xi32>
    %30 = arith.cmpi slt, %26, %29 : vector<1x128xi32>
    %cst = arith.constant 0xFF800000 : f32
    %31 = vector.shape_cast %30 : vector<1x128xi1> to vector<1x128xi1>
    %32 = vector.broadcast %31 : vector<1x128xi1> to vector<8x128xi1>
    %33 = vector.broadcast %cst : f32 to vector<8x128xf32>
    %34 = arith.select %32, %27, %33 : vector<8x128xi1>, vector<8x128xf32>
    %35 = arith.maximumf %8, %34 : vector<8x128xf32>
    %c1_i32_12 = arith.constant 1 : i32
    %36 = vector.broadcast %c1_i32_12 : i32 to vector<1x128xi32>
    %37 = arith.cmpi sge, %26, %36 : vector<1x128xi32>
    %cst_13 = arith.constant 0xFF800000 : f32
    %38 = vector.shape_cast %37 : vector<1x128xi1> to vector<1x128xi1>
    %39 = vector.broadcast %38 : vector<1x128xi1> to vector<8x128xi1>
    %40 = vector.broadcast %cst_13 : f32 to vector<8x128xf32>
    %41 = arith.select %39, %28, %40 : vector<8x128xi1>, vector<8x128xf32>
    %42 = arith.maximumf %35, %41 : vector<8x128xf32>
    %c126_i32 = arith.constant 126 : i32
    %43 = tpu.dynamic_rotate %42 by %c126_i32 dim 1 : vector<8x128xf32>, i32 -> vector<8x128xf32>
    %c2_i32 = arith.constant 2 : i32
    %44 = tpu.dynamic_rotate %42 by %c2_i32 dim 1 : vector<8x128xf32>, i32 -> vector<8x128xf32>
    %c6_i32 = arith.constant 6 : i32
    %45 = vector.broadcast %c6_i32 : i32 to vector<1x128xi32>
    %46 = arith.cmpi slt, %26, %45 : vector<1x128xi32>
    %cst_14 = arith.constant 0xFF800000 : f32
    %47 = vector.shape_cast %46 : vector<1x128xi1> to vector<1x128xi1>
    %48 = vector.broadcast %47 : vector<1x128xi1> to vector<8x128xi1>
    %49 = vector.broadcast %cst_14 : f32 to vector<8x128xf32>
    %50 = arith.select %48, %43, %49 : vector<8x128xi1>, vector<8x128xf32>
    %51 = arith.maximumf %42, %50 : vector<8x128xf32>
    %c2_i32_15 = arith.constant 2 : i32
    %52 = vector.broadcast %c2_i32_15 : i32 to vector<1x128xi32>
    %53 = arith.cmpi sge, %26, %52 : vector<1x128xi32>
    %cst_16 = arith.constant 0xFF800000 : f32
    %54 = vector.shape_cast %53 : vector<1x128xi1> to vector<1x128xi1>
    %55 = vector.broadcast %54 : vector<1x128xi1> to vector<8x128xi1>
    %56 = vector.broadcast %cst_16 : f32 to vector<8x128xf32>
    %57 = arith.select %55, %44, %56 : vector<8x128xi1>, vector<8x128xf32>
    %58 = arith.maximumf %51, %57 : vector<8x128xf32>
    %c124_i32 = arith.constant 124 : i32
    %59 = tpu.dynamic_rotate %58 by %c124_i32 dim 1 : vector<8x128xf32>, i32 -> vector<8x128xf32>
    %c4_i32 = arith.constant 4 : i32
    %60 = tpu.dynamic_rotate %58 by %c4_i32 dim 1 : vector<8x128xf32>, i32 -> vector<8x128xf32>
    %c4_i32_17 = arith.constant 4 : i32
    %61 = vector.broadcast %c4_i32_17 : i32 to vector<1x128xi32>
    %62 = arith.cmpi slt, %26, %61 : vector<1x128xi32>
    %cst_18 = arith.constant 0xFF800000 : f32
    %63 = vector.shape_cast %62 : vector<1x128xi1> to vector<1x128xi1>
    %64 = vector.broadcast %63 : vector<1x128xi1> to vector<8x128xi1>
    %65 = vector.broadcast %cst_18 : f32 to vector<8x128xf32>
    %66 = arith.select %64, %59, %65 : vector<8x128xi1>, vector<8x128xf32>
    %67 = arith.maximumf %58, %66 : vector<8x128xf32>
    %c4_i32_19 = arith.constant 4 : i32
    %68 = vector.broadcast %c4_i32_19 : i32 to vector<1x128xi32>
    %69 = arith.cmpi sge, %26, %68 : vector<1x128xi32>
    %cst_20 = arith.constant 0xFF800000 : f32
    %70 = vector.shape_cast %69 : vector<1x128xi1> to vector<1x128xi1>
    %71 = vector.broadcast %70 : vector<1x128xi1> to vector<8x128xi1>
    %72 = vector.broadcast %cst_20 : f32 to vector<8x128xf32>
    %73 = arith.select %71, %60, %72 : vector<8x128xi1>, vector<8x128xf32>
    %74 = arith.maximumf %67, %73 : vector<8x128xf32>
    %75 = arith.subf %8, %74 : vector<8x128xf32>
    %76 = math.exp %75 : vector<8x128xf32>
    %c1_i32_21 = arith.constant 1 : i32
    %77 = vector.broadcast %c1_i32_21 : i32 to vector<1x128xi32>
    %78 = arith.cmpi sge, %26, %77 : vector<1x128xi32>
    %c1_i32_22 = arith.constant 1 : i32
    %79 = tpu.dynamic_rotate %76 by %c1_i32_22 dim 1 : vector<8x128xf32>, i32 -> vector<8x128xf32>
    %cst_23 = arith.constant 0.000000e+00 : f32
    %80 = vector.shape_cast %78 : vector<1x128xi1> to vector<1x128xi1>
    %81 = vector.broadcast %80 : vector<1x128xi1> to vector<8x128xi1>
    %82 = vector.broadcast %cst_23 : f32 to vector<8x128xf32>
    %83 = arith.select %81, %79, %82 : vector<8x128xi1>, vector<8x128xf32>
    %84 = arith.addf %76, %83 : vector<8x128xf32>
    %c7_i32_24 = arith.constant 7 : i32
    %85 = vector.broadcast %c7_i32_24 : i32 to vector<1x128xi32>
    %86 = arith.cmpi slt, %26, %85 : vector<1x128xi32>
    %c127_i32_25 = arith.constant 127 : i32
    %87 = tpu.dynamic_rotate %76 by %c127_i32_25 dim 1 : vector<8x128xf32>, i32 -> vector<8x128xf32>
    %cst_26 = arith.constant 0.000000e+00 : f32
    %88 = vector.shape_cast %86 : vector<1x128xi1> to vector<1x128xi1>
    %89 = vector.broadcast %88 : vector<1x128xi1> to vector<8x128xi1>
    %90 = vector.broadcast %cst_26 : f32 to vector<8x128xf32>
    %91 = arith.select %89, %87, %90 : vector<8x128xi1>, vector<8x128xf32>
    %92 = arith.addf %76, %91 : vector<8x128xf32>
    %c2_i32_27 = arith.constant 2 : i32
    %93 = vector.broadcast %c2_i32_27 : i32 to vector<1x128xi32>
    %94 = arith.cmpi sge, %26, %93 : vector<1x128xi32>
    %c2_i32_28 = arith.constant 2 : i32
    %95 = tpu.dynamic_rotate %84 by %c2_i32_28 dim 1 : vector<8x128xf32>, i32 -> vector<8x128xf32>
    %cst_29 = arith.constant 0.000000e+00 : f32
    %96 = vector.shape_cast %94 : vector<1x128xi1> to vector<1x128xi1>
    %97 = vector.broadcast %96 : vector<1x128xi1> to vector<8x128xi1>
    %98 = vector.broadcast %cst_29 : f32 to vector<8x128xf32>
    %99 = arith.select %97, %95, %98 : vector<8x128xi1>, vector<8x128xf32>
    %100 = arith.addf %84, %99 : vector<8x128xf32>
    %c6_i32_30 = arith.constant 6 : i32
    %101 = vector.broadcast %c6_i32_30 : i32 to vector<1x128xi32>
    %102 = arith.cmpi slt, %26, %101 : vector<1x128xi32>
    %c126_i32_31 = arith.constant 126 : i32
    %103 = tpu.dynamic_rotate %92 by %c126_i32_31 dim 1 : vector<8x128xf32>, i32 -> vector<8x128xf32>
    %cst_32 = arith.constant 0.000000e+00 : f32
    %104 = vector.shape_cast %102 : vector<1x128xi1> to vector<1x128xi1>
    %105 = vector.broadcast %104 : vector<1x128xi1> to vector<8x128xi1>
    %106 = vector.broadcast %cst_32 : f32 to vector<8x128xf32>
    %107 = arith.select %105, %103, %106 : vector<8x128xi1>, vector<8x128xf32>
    %108 = arith.addf %92, %107 : vector<8x128xf32>
    %c4_i32_33 = arith.constant 4 : i32
    %109 = vector.broadcast %c4_i32_33 : i32 to vector<1x128xi32>
    %110 = arith.cmpi sge, %26, %109 : vector<1x128xi32>
    %c4_i32_34 = arith.constant 4 : i32
    %111 = tpu.dynamic_rotate %100 by %c4_i32_34 dim 1 : vector<8x128xf32>, i32 -> vector<8x128xf32>
    %cst_35 = arith.constant 0.000000e+00 : f32
    %112 = vector.shape_cast %110 : vector<1x128xi1> to vector<1x128xi1>
    %113 = vector.broadcast %112 : vector<1x128xi1> to vector<8x128xi1>
    %114 = vector.broadcast %cst_35 : f32 to vector<8x128xf32>
    %115 = arith.select %113, %111, %114 : vector<8x128xi1>, vector<8x128xf32>
    %116 = arith.addf %100, %115 : vector<8x128xf32>
    %c4_i32_36 = arith.constant 4 : i32
    %117 = vector.broadcast %c4_i32_36 : i32 to vector<1x128xi32>
    %118 = arith.cmpi slt, %26, %117 : vector<1x128xi32>
    %c124_i32_37 = arith.constant 124 : i32
    %119 = tpu.dynamic_rotate %108 by %c124_i32_37 dim 1 : vector<8x128xf32>, i32 -> vector<8x128xf32>
    %cst_38 = arith.constant 0.000000e+00 : f32
    %120 = vector.shape_cast %118 : vector<1x128xi1> to vector<1x128xi1>
    %121 = vector.broadcast %120 : vector<1x128xi1> to vector<8x128xi1>
    %122 = vector.broadcast %cst_38 : f32 to vector<8x128xf32>
    %123 = arith.select %121, %119, %122 : vector<8x128xi1>, vector<8x128xf32>
    %124 = arith.addf %108, %123 : vector<8x128xf32>
    %125 = arith.addf %116, %124 : vector<8x128xf32>
    %126 = arith.subf %125, %76 : vector<8x128xf32>
    %cst_39 = arith.constant 0.000000e+00 : f32
    %127 = vector.broadcast %cst_39 : f32 to vector<8x128xf32>
    %128 = arith.cmpf one, %9, %127 : vector<8x128xf32>
    %cst_40 = arith.constant 1.000000e+00 : f32
    %cst_41 = arith.constant 0.000000e+00 : f32
    %129 = vector.broadcast %cst_40 : f32 to vector<8x128xf32>
    %130 = vector.broadcast %cst_41 : f32 to vector<8x128xf32>
    %131 = arith.select %128, %129, %130 : vector<8x128xi1>, vector<8x128xf32>
    %132 = arith.truncf %131 : vector<8x128xf32> to vector<8x128xbf16>
    %c0_42 = arith.constant 0 : index
    %c0_43 = arith.constant 0 : index
    %133 = vector.load %arg4[%c0_42, %c0_43] : memref<128x128xbf16, #tpu.memory_space<vmem>>, vector<128x128xbf16>
    %cst_44 = arith.constant dense<0.000000e+00> : vector<8x128xf32>
    %134 = tpu.matmul %132, %133, %cst_44 {dimension_numbers = #tpu.dot_dimension_numbers<[1], [0], [0], [1], [0, 0, 1, 1], [], []>} : vector<8x128xbf16>, vector<128x128xbf16>, vector<8x128xf32> -> vector<8x128xf32>
    %c1_i32_45 = arith.constant 1 : i32
    %135 = arith.muli %arg0, %c1_i32_45 : i32
    %136 = arith.addi %135, %arg1 : i32
    %c8_i32_46 = arith.constant 8 : i32
    %137 = arith.muli %136, %c8_i32_46 : i32
    %138 = tpu.iota {dimensions = array<i32: 0>} : vector<8x1xi32>
    %139 = vector.broadcast %137 : i32 to vector<8x1xi32>
    %140 = arith.addi %139, %138 : vector<8x1xi32>
    %cst_47 = arith.constant 5.000000e-01 : f32
    %141 = vector.broadcast %cst_47 : f32 to vector<8x128xf32>
    %142 = arith.cmpf ogt, %134, %141 : vector<8x128xf32>
    %c8_i32_48 = arith.constant 8 : i32
    %143 = vector.broadcast %c8_i32_48 : i32 to vector<8x1xi32>
    %144 = arith.cmpi slt, %140, %143 : vector<8x1xi32>
    %145 = vector.broadcast %144 : vector<8x1xi1> to vector<8x128xi1>
    %146 = arith.andi %142, %145 : vector<8x128xi1>
    %147 = math.log %126 : vector<8x128xf32>
    %148 = arith.addf %74, %147 : vector<8x128xf32>
    %cst_49 = arith.constant 1.250000e-01 : f32
    %149 = vector.broadcast %cst_49 : f32 to vector<8x128xf32>
    %150 = arith.mulf %148, %149 : vector<8x128xf32>
    %151 = arith.mulf %8, %9 : vector<8x128xf32>
    %152 = arith.subf %150, %151 : vector<8x128xf32>
    %cst_50 = arith.constant 0.000000e+00 : f32
    %153 = vector.broadcast %cst_50 : f32 to vector<8x128xf32>
    %154 = arith.select %146, %152, %153 : vector<8x128xi1>, vector<8x128xf32>
    %cst_51 = arith.constant 1.250000e-01 : f32
    %cst_52 = arith.constant 0.000000e+00 : f32
    %155 = vector.broadcast %cst_51 : f32 to vector<8x128xf32>
    %156 = vector.broadcast %cst_52 : f32 to vector<8x128xf32>
    %157 = arith.select %146, %155, %156 : vector<8x128xi1>, vector<8x128xf32>
    %c0_53 = arith.constant 0 : index
    %c0_54 = arith.constant 0 : index
    %158 = vector.load %arg8[%c0_53, %c0_54] : memref<8x128xf32, #tpu.memory_space<vmem>>, vector<8x128xf32>
    %159 = arith.addf %158, %154 : vector<8x128xf32>
    %c0_55 = arith.constant 0 : index
    %c0_56 = arith.constant 0 : index
    %160 = vector.load %arg8[%c0_55, %c0_56] : memref<8x128xf32, #tpu.memory_space<vmem>>, vector<8x128xf32>
    tpu.vector_store %arg8[%c0_55, %c0_56], %159 {strides = array<i32>} : memref<8x128xf32, #tpu.memory_space<vmem>>, vector<8x128xf32>,
    %c0_57 = arith.constant 0 : index
    %c0_58 = arith.constant 0 : index
    %161 = vector.load %arg9[%c0_57, %c0_58] : memref<8x128xf32, #tpu.memory_space<vmem>>, vector<8x128xf32>
    %162 = arith.addf %161, %157 : vector<8x128xf32>
    %c0_59 = arith.constant 0 : index
    %c0_60 = arith.constant 0 : index
    %163 = vector.load %arg9[%c0_59, %c0_60] : memref<8x128xf32, #tpu.memory_space<vmem>>, vector<8x128xf32>
    tpu.vector_store %arg9[%c0_59, %c0_60], %162 {strides = array<i32>} : memref<8x128xf32, #tpu.memory_space<vmem>>, vector<8x128xf32>,
    return
  }
  func.func @transform_0(%arg0: i32, %arg1: i32) -> (i32, i32) {
    %c1_i32 = arith.constant 1 : i32
    %0 = arith.muli %arg0, %c1_i32 : i32
    %1 = arith.addi %0, %arg1 : i32
    %c0_i32 = arith.constant 0 : i32
    %2 = arith.minsi %1, %c0_i32 : i32
    %c0_i32_0 = arith.constant 0 : i32
    %c0_i32_1 = arith.constant 0 : i32
    return %2, %c0_i32_0 : i32, i32
  }
  func.func @transform_1(%arg0: i32, %arg1: i32) -> (i32, i32) {
    %c1_i32 = arith.constant 1 : i32
    %0 = arith.muli %arg0, %c1_i32 : i32
    %1 = arith.addi %0, %arg1 : i32
    %c0_i32 = arith.constant 0 : i32
    %2 = arith.minsi %1, %c0_i32 : i32
    %c0_i32_0 = arith.constant 0 : i32
    %c0_i32_1 = arith.constant 0 : i32
    return %2, %c0_i32_0 : i32, i32
  }
  func.func @transform_2(%arg0: i32, %arg1: i32) -> (i32, i32) {
    %c0_i32 = arith.constant 0 : i32
    %c0_i32_0 = arith.constant 0 : i32
    %c0_i32_1 = arith.constant 0 : i32
    return %c0_i32, %c0_i32_0 : i32, i32
  }
  func.func @transform_3(%arg0: i32, %arg1: i32) -> (i32, i32, i32) {
    %c0_i32 = arith.constant 0 : i32
    %c0_i32_0 = arith.constant 0 : i32
    %c0_i32_1 = arith.constant 0 : i32
    %c0_i32_2 = arith.constant 0 : i32
    return %c0_i32, %c0_i32_0, %c0_i32_1 : i32, i32, i32
  }
  func.func @transform_4(%arg0: i32, %arg1: i32) -> (i32, i32, i32) {
    %c0_i32 = arith.constant 0 : i32
    %c0_i32_0 = arith.constant 0 : i32
    %c0_i32_1 = arith.constant 0 : i32
    %c0_i32_2 = arith.constant 0 : i32
    return %c0_i32, %c0_i32_0, %c0_i32_1 : i32, i32, i32
  }
  func.func @transform_5(%arg0: i32, %arg1: i32) -> (i32, i32, i32) {
    %c0_i32 = arith.constant 0 : i32
    %c0_i32_0 = arith.constant 0 : i32
    %c0_i32_1 = arith.constant 0 : i32
    %c0_i32_2 = arith.constant 0 : i32
    return %c0_i32, %c0_i32_0, %c0_i32_1 : i32, i32, i32
  }
  func.func @transform_6(%arg0: i32, %arg1: i32) -> (i32, i32) {
    %c0_i32 = arith.constant 0 : i32
    %c0_i32_0 = arith.constant 0 : i32
    return %arg0, %c0_i32 : i32, i32
  }
  func.func @transform_7(%arg0: i32, %arg1: i32) -> (i32, i32) {
    %c0_i32 = arith.constant 0 : i32
    %c0_i32_0 = arith.constant 0 : i32
    return %arg0, %c0_i32 : i32, i32
  }
  func.func @transform_8(%arg0: i32, %arg1: i32) -> (i32, i32) {
    %c0_i32 = arith.constant 0 : i32
    %c0_i32_0 = arith.constant 0 : i32
    return %arg0, %c0_i32 : i32, i32
  }
  func.func @transform_9(%arg0: i32, %arg1: i32) -> (i32, i32) {
    %c0_i32 = arith.constant 0 : i32
    %c0_i32_0 = arith.constant 0 : i32
    return %arg0, %c0_i32 : i32, i32
  }
  func.func @transform_10(%arg0: i32, %arg1: i32) -> (i32, i32) {
    %c0_i32 = arith.constant 0 : i32
    %c0_i32_0 = arith.constant 0 : i32
    return %arg0, %c0_i32 : i32, i32
  }
}

</mosaic_0001>

<llo_original>
// kernel: tpu_custom_call.1
$region0: #{tpu_custom_call.1}
  #allocation0 [shape = 'u32[]', space=smem, size = 0x4, offset = 0x4, fixed_abs, tag = 'smem constant byte address 0x4 - core index']
  #allocation1 [shape = 'u32[72,128]{1,0:T(1,128)}', space=vmem, size = 0x9000, scoped, tag = 'internal scratch']
  %s0 = inlined_call_operand.hbm [shape: f32[8,128], index: 0, kind: input, shape index: {}]
  %s1 = inlined_call_operand.hbm [shape: f32[8,128], index: 1, kind: input, shape index: {}]
  %s2 = inlined_call_operand.hbm [shape: bf16[128,128], index: 2, kind: input, shape index: {}]
  %s3 = inlined_call_operand.hbm [shape: f32[2,8,16], index: 3, kind: input, shape index: {}]
  %s4 = inlined_call_operand.hbm [shape: f32[2,8,16], index: 4, kind: input, shape index: {}]
  %s5 = inlined_call_operand.vmem [shape: f32[1,1,16], index: 5, kind: input, shape index: {}]
  %s6 = inlined_call_operand.hbm [shape: f32[16,128], index: 6, kind: output, shape index: {0}]
  %s7 = inlined_call_operand.hbm [shape: f32[16,128], index: 7, kind: output, shape index: {1}]
  %s8 = inlined_call_operand.hbm [shape: f32[16,128], index: 8, kind: output, shape index: {2}]
  %s9 = inlined_call_operand.hbm [shape: f32[16,128], index: 9, kind: output, shape index: {3}]
  %s10 = inlined_call_operand.hbm [shape: f32[16,128], index: 10, kind: output, shape index: {4}]
  %11 = xla_tuple %s6, %s7, %s8, %s9, %s10
  %s12 = sld [smem:[#allocation0]]
  $region117: #{tpu_custom_call.1} parent=0
    _
  %s14 = ssub.s32 1, %s12
  %s15 = scalar_select 0, %s14, %s12
  $region1: #{tpu_custom_call.1} parent=0
    #allocation2 [shape = 'u8[8192]{0}', space=vmem, size = 0x2000, scoped, tag = 'input window, operand 0']
    #allocation3 [shape = 's32[2]{0}', space=sflag, size = 0x8, scoped, tag = 'scoped memory for tpu_custom_call.1']
    #allocation4 [shape = 's32[2]{0}', space=sflag, size = 0x8, scoped, tag = 'scoped memory for tpu_custom_call.1']
    #allocation5 [shape = 'u8[8192]{0}', space=vmem, size = 0x2000, scoped, tag = 'input window, operand 1']
    #allocation6 [shape = 's32[2]{0}', space=sflag, size = 0x8, scoped, tag = 'scoped memory for tpu_custom_call.1']
    #allocation7 [shape = 'u8[32768]{0}', space=vmem, size = 0x8000, scoped, tag = 'input window, operand 2, single buffered']
    #allocation8 [shape = 'u8[8192]{0}', space=vmem, size = 0x2000, scoped, tag = 'input window, operand 3, single buffered']
    #allocation9 [shape = 's32[1]{0}', space=sflag, size = 0x4, scoped, tag = 'scoped memory for tpu_custom_call.1']
    #allocation10 [shape = 'u8[8192]{0}', space=vmem, size = 0x2000, scoped, tag = 'input window, operand 4, single buffered']
    #allocation11 [shape = 'u8[8192]{0}', space=vmem, size = 0x2000, scoped, tag = 'output window, operand 0']
    #allocation12 [shape = 'u8[8192]{0}', space=vmem, size = 0x2000, scoped, tag = 'output window, operand 1']
    #allocation13 [shape = 's32[2]{0}', space=sflag, size = 0x8, scoped, tag = 'scoped memory for tpu_custom_call.1']
    #allocation14 [shape = 'u8[8192]{0}', space=vmem, size = 0x2000, scoped, tag = 'output window, operand 2']
    #allocation15 [shape = 'u8[8192]{0}', space=vmem, size = 0x2000, scoped, tag = 'output window, operand 3']
    #allocation16 [shape = 's32[2]{0}', space=sflag, size = 0x8, scoped, tag = 'scoped memory for tpu_custom_call.1']
    #allocation17 [shape = 'u8[8192]{0}', space=vmem, size = 0x2000, scoped, tag = 'output window, operand 4']
    %16 = vsyncpa [#allocation3], 0
    %s17 = scalar_lea.sflag [#allocation3], 1
    %18 = vsyncpa %s17, 0
    %19 = vsyncpa [#allocation6], 0
    %s20 = scalar_lea.sflag [#allocation6], 1
    %21 = vsyncpa %s20, 0
    %22 = vsyncpa [#allocation9], 0
    %23 = vsyncpa [#allocation4], 0
    %s24 = scalar_lea.sflag [#allocation4], 1
    %25 = vsyncpa %s24, 0
    %26 = vsyncpa [#allocation13], 0
    %s27 = scalar_lea.sflag [#allocation13], 1
    %28 = vsyncpa %s27, 0
    %29 = vsyncpa [#allocation16], 0
    %s30 = scalar_lea.sflag [#allocation16], 1
    %31 = vsyncpa %s30, 0
    loop: start=0, step=1, limit=4
    $region2: #{tpu_custom_call.1} parent=1 // loop_pre_header
      _
    $region3: #{tpu_custom_call.1} parent=1 // loop_header
      %s33 = sphi 0, %s37
      %p34 = scmp.ge.s32.totalorder %s33, 4
      %s40 = sphi 0, %s52
      %s41 = sphi 0, %s48
      %s42 = sphi 0, %s40
      %s43 = sphi 0, %s41
      %s44 = sphi 0, %s42
      %s45 = sphi 0, %s43
      %s61 = sphi 0, %s63
      %s64 = sphi 0, %s61
      %s65 = sphi 0, %s64
      %s81 = sphi 0, %s65
      %s93 = sphi 0, %s95
      %s96 = sphi 0, %s93
      %s97 = sphi 0, %s96
      %s113 = sphi 0, %s97
      %s117 = sphi 0, %s117
      %s119 = sphi 0, %s117
      %s120 = sphi 0, %s119
      %s134 = sphi 0, %s120
      %s138 = sphi 0, %s138
      %s140 = sphi 0, %s138
      %s141 = sphi 0, %s140
      %s155 = sphi 0, %s141
      %s159 = sphi 0, %s159
      %s161 = sphi 0, %s159
      %s162 = sphi 0, %s161
      %s176 = sphi 0, %s162
      %s180 = sphi 0, %s180
      %s182 = sphi 0, %s180
      %s183 = sphi 0, %s182
      %s197 = sphi 0, %s183
      %s203 = sphi 0, %s205
      %s206 = sphi 0, %s203
      %s207 = sphi 0, %s206
      %s223 = sphi 0, %s207
      %s229 = sphi 0, %s231
      %s232 = sphi 0, %s229
      %s233 = sphi 0, %s232
      %s249 = sphi 0, %s233
      %s255 = sphi 0, %s257
      %s258 = sphi 0, %s255
      %s259 = sphi 0, %s258
      %s275 = sphi 0, %s259
      %s281 = sphi 0, %s283
      %s284 = sphi 0, %s281
      %s285 = sphi 0, %s284
      %s301 = sphi 0, %s285
      %s307 = sphi 0, %s309
      %s310 = sphi 0, %s307
      %s311 = sphi 0, %s310
      %s327 = sphi 0, %s311
    $region4: #{tpu_custom_call.1} parent=1 // loop_header_branch
      %36 = sbr.rel (%p34) target = $region8
    $region5: #{tpu_custom_call.1} parent=1 // loop_body
      %s38 = ssub.s32 %s33, 1
      %s39 = ssub.s32 %s33, 2
      %s46 = sadd.s32 1, %s41
      %p47 = scmp.ge.s32.totalorder %s46, 1
      %s48 = scalar_select %p47, 0, %s46
      %s49 = sadd.s32 1, %s40
      %s50 = scalar_select %p47, %s49, %s40
      %p51 = scmp.ge.s32.totalorder %s50, 2
      %s52 = scalar_select %p51, 0, %s50
      %s53 = sadd.s32 %s40, %s41
      %p54 = scmp.lt.s32.totalorder %s53, 0
      %s55 = scalar_select %p54, %s53, 0
      %s56 = sadd.s32 %s52, %s48
      %p57 = scmp.lt.s32.totalorder %s56, 0
      %s58 = scalar_select %p57, %s56, 0
      %s59 = ssub.s32 %s55, %s58
      %p60 = scmp.eq.s32.totalorder %s59, 0
      %s62 = sadd.s32 %s61, 1
      %s63 = scalar_select %p60, %s61, %s62
      %p66 = pneg %p60
      %p67 = scmp.eq.s32.totalorder %s33, 1
      %p68 = por %p66, %p67
      %p69 = scmp.ne.s32.totalorder %s61, %s64
      %p70 = scmp.eq.s32.totalorder %s33, 0
      %p71 = por %p69, %p70
      %p72 = scmp.ne.s32.totalorder %s61, %s64
      %p73 = scmp.eq.s32.totalorder %s38, 1
      %p74 = por %p72, %p73
      %p75 = scmp.ne.s32.totalorder %s64, %s65
      %p76 = scmp.eq.s32.totalorder %s38, 0
      %p77 = por %p75, %p76
      %p78 = scmp.ne.s32.totalorder %s64, %s65
      %p79 = scmp.eq.s32.totalorder %s39, 1
      %p80 = por %p78, %p79
      %p82 = scmp.ne.s32.totalorder %s65, %s81
      %p83 = scmp.eq.s32.totalorder %s39, 0
      %p84 = por %p82, %p83
      %s85 = sadd.s32 %s40, %s41
      %p86 = scmp.lt.s32.totalorder %s85, 0
      %s87 = scalar_select %p86, %s85, 0
      %s88 = sadd.s32 %s52, %s48
      %p89 = scmp.lt.s32.totalorder %s88, 0
      %s90 = scalar_select %p89, %s88, 0
      %s91 = ssub.s32 %s87, %s90
      %p92 = scmp.eq.s32.totalorder %s91, 0
      %s94 = sadd.s32 %s93, 1
      %s95 = scalar_select %p92, %s93, %s94
      %p98 = pneg %p92
      %p99 = scmp.eq.s32.totalorder %s33, 1
      %p100 = por %p98, %p99
      %p101 = scmp.ne.s32.totalorder %s93, %s96
      %p102 = scmp.eq.s32.totalorder %s33, 0
      %p103 = por %p101, %p102
      %p104 = scmp.ne.s32.totalorder %s93, %s96
      %p105 = scmp.eq.s32.totalorder %s38, 1
      %p106 = por %p104, %p105
      %p107 = scmp.ne.s32.totalorder %s96, %s97
      %p108 = scmp.eq.s32.totalorder %s38, 0
      %p109 = por %p107, %p108
      %p110 = scmp.ne.s32.totalorder %s96, %s97
      %p111 = scmp.eq.s32.totalorder %s39, 1
      %p112 = por %p110, %p111
      %p114 = scmp.ne.s32.totalorder %s97, %s113
      %p115 = scmp.eq.s32.totalorder %s39, 0
      %p116 = por %p114, %p115
      %s118 = sadd.s32 %s117, 1
      %p121 = scmp.eq.s32.totalorder %s33, 1
      %p122 = scmp.ne.s32.totalorder %s117, %s119
      %p123 = scmp.eq.s32.totalorder %s33, 0
      %p124 = por %p122, %p123
      %p125 = scmp.ne.s32.totalorder %s117, %s119
      %p126 = scmp.eq.s32.totalorder %s38, 1
      %p127 = por %p125, %p126
      %p128 = scmp.ne.s32.totalorder %s119, %s120
      %p129 = scmp.eq.s32.totalorder %s38, 0
      %p130 = por %p128, %p129
      %p131 = scmp.ne.s32.totalorder %s119, %s120
      %p132 = scmp.eq.s32.totalorder %s39, 1
      %p133 = por %p131, %p132
      %p135 = scmp.ne.s32.totalorder %s120, %s134
      %p136 = scmp.eq.s32.totalorder %s39, 0
      %p137 = por %p135, %p136
      %s139 = sadd.s32 %s138, 1
      %p142 = scmp.eq.s32.totalorder %s33, 1
      %p143 = scmp.ne.s32.totalorder %s138, %s140
      %p144 = scmp.eq.s32.totalorder %s33, 0
      %p145 = por %p143, %p144
      %p146 = scmp.ne.s32.totalorder %s138, %s140
      %p147 = scmp.eq.s32.totalorder %s38, 1
      %p148 = por %p146, %p147
      %p149 = scmp.ne.s32.totalorder %s140, %s141
      %p150 = scmp.eq.s32.totalorder %s38, 0
      %p151 = por %p149, %p150
      %p152 = scmp.ne.s32.totalorder %s140, %s141
      %p153 = scmp.eq.s32.totalorder %s39, 1
      %p154 = por %p152, %p153
      %p156 = scmp.ne.s32.totalorder %s141, %s155
      %p157 = scmp.eq.s32.totalorder %s39, 0
      %p158 = por %p156, %p157
      %s160 = sadd.s32 %s159, 1
      %p163 = scmp.eq.s32.totalorder %s33, 1
      %p164 = scmp.ne.s32.totalorder %s159, %s161
      %p165 = scmp.eq.s32.totalorder %s33, 0
      %p166 = por %p164, %p165
      %p167 = scmp.ne.s32.totalorder %s159, %s161
      %p168 = scmp.eq.s32.totalorder %s38, 1
      %p169 = por %p167, %p168
      %p170 = scmp.ne.s32.totalorder %s161, %s162
      %p171 = scmp.eq.s32.totalorder %s38, 0
      %p172 = por %p170, %p171
      %p173 = scmp.ne.s32.totalorder %s161, %s162
      %p174 = scmp.eq.s32.totalorder %s39, 1
      %p175 = por %p173, %p174
      %p177 = scmp.ne.s32.totalorder %s162, %s176
      %p178 = scmp.eq.s32.totalorder %s39, 0
      %p179 = por %p177, %p178
      %s181 = sadd.s32 %s180, 1
      %p184 = scmp.eq.s32.totalorder %s33, 1
      %p185 = scmp.ne.s32.totalorder %s180, %s182
      %p186 = scmp.eq.s32.totalorder %s33, 0
      %p187 = por %p185, %p186
      %p188 = scmp.ne.s32.totalorder %s180, %s182
      %p189 = scmp.eq.s32.totalorder %s38, 1
      %p190 = por %p188, %p189
      %p191 = scmp.ne.s32.totalorder %s182, %s183
      %p192 = scmp.eq.s32.totalorder %s38, 0
      %p193 = por %p191, %p192
      %p194 = scmp.ne.s32.totalorder %s182, %s183
      %p195 = scmp.eq.s32.totalorder %s39, 1
      %p196 = por %p194, %p195
      %p198 = scmp.ne.s32.totalorder %s183, %s197
      %p199 = scmp.eq.s32.totalorder %s39, 0
      %p200 = por %p198, %p199
      %s201 = ssub.s32 %s40, %s52
      %p202 = scmp.eq.s32.totalorder %s201, 0
      %s204 = sadd.s32 %s203, 1
      %s205 = scalar_select %p202, %s203, %s204
      %p208 = pneg %p202
      %p209 = scmp.eq.s32.totalorder %s33, 1
      %p210 = por %p208, %p209
      %p211 = scmp.ne.s32.totalorder %s203, %s206
      %p212 = scmp.eq.s32.totalorder %s33, 0
      %p213 = por %p211, %p212
      %p214 = scmp.ne.s32.totalorder %s203, %s206
      %p215 = scmp.eq.s32.totalorder %s38, 1
      %p216 = por %p214, %p215
      %p217 = scmp.ne.s32.totalorder %s206, %s207
      %p218 = scmp.eq.s32.totalorder %s38, 0
      %p219 = por %p217, %p218
      %p220 = scmp.ne.s32.totalorder %s206, %s207
      %p221 = scmp.eq.s32.totalorder %s39, 1
      %p222 = por %p220, %p221
      %p224 = scmp.ne.s32.totalorder %s207, %s223
      %p225 = scmp.eq.s32.totalorder %s39, 0
      %p226 = por %p224, %p225
      %s227 = ssub.s32 %s40, %s52
      %p228 = scmp.eq.s32.totalorder %s227, 0
      %s230 = sadd.s32 %s229, 1
      %s231 = scalar_select %p228, %s229, %s230
      %p234 = pneg %p228
      %p235 = scmp.eq.s32.totalorder %s33, 1
      %p236 = por %p234, %p235
      %p237 = scmp.ne.s32.totalorder %s229, %s232
      %p238 = scmp.eq.s32.totalorder %s33, 0
      %p239 = por %p237, %p238
      %p240 = scmp.ne.s32.totalorder %s229, %s232
      %p241 = scmp.eq.s32.totalorder %s38, 1
      %p242 = por %p240, %p241
      %p243 = scmp.ne.s32.totalorder %s232, %s233
      %p244 = scmp.eq.s32.totalorder %s38, 0
      %p245 = por %p243, %p244
      %p246 = scmp.ne.s32.totalorder %s232, %s233
      %p247 = scmp.eq.s32.totalorder %s39, 1
      %p248 = por %p246, %p247
      %p250 = scmp.ne.s32.totalorder %s233, %s249
      %p251 = scmp.eq.s32.totalorder %s39, 0
      %p252 = por %p250, %p251
      %s253 = ssub.s32 %s40, %s52
      %p254 = scmp.eq.s32.totalorder %s253, 0
      %s256 = sadd.s32 %s255, 1
      %s257 = scalar_select %p254, %s255, %s256
      %p260 = pneg %p254
      %p261 = scmp.eq.s32.totalorder %s33, 1
      %p262 = por %p260, %p261
      %p263 = scmp.ne.s32.totalorder %s255, %s258
      %p264 = scmp.eq.s32.totalorder %s33, 0
      %p265 = por %p263, %p264
      %p266 = scmp.ne.s32.totalorder %s255, %s258
      %p267 = scmp.eq.s32.totalorder %s38, 1
      %p268 = por %p266, %p267
      %p269 = scmp.ne.s32.totalorder %s258, %s259
      %p270 = scmp.eq.s32.totalorder %s38, 0
      %p271 = por %p269, %p270
      %p272 = scmp.ne.s32.totalorder %s258, %s259
      %p273 = scmp.eq.s32.totalorder %s39, 1
      %p274 = por %p272, %p273
      %p276 = scmp.ne.s32.totalorder %s259, %s275
      %p277 = scmp.eq.s32.totalorder %s39, 0
      %p278 = por %p276, %p277
      %s279 = ssub.s32 %s40, %s52
      %p280 = scmp.eq.s32.totalorder %s279, 0
      %s282 = sadd.s32 %s281, 1
      %s283 = scalar_select %p280, %s281, %s282
      %p286 = pneg %p280
      %p287 = scmp.eq.s32.totalorder %s33, 1
      %p288 = por %p286, %p287
      %p289 = scmp.ne.s32.totalorder %s281, %s284
      %p290 = scmp.eq.s32.totalorder %s33, 0
      %p291 = por %p289, %p290
      %p292 = scmp.ne.s32.totalorder %s281, %s284
      %p293 = scmp.eq.s32.totalorder %s38, 1
      %p294 = por %p292, %p293
      %p295 = scmp.ne.s32.totalorder %s284, %s285
      %p296 = scmp.eq.s32.totalorder %s38, 0
      %p297 = por %p295, %p296
      %p298 = scmp.ne.s32.totalorder %s284, %s285
      %p299 = scmp.eq.s32.totalorder %s39, 1
      %p300 = por %p298, %p299
      %p302 = scmp.ne.s32.totalorder %s285, %s301
      %p303 = scmp.eq.s32.totalorder %s39, 0
      %p304 = por %p302, %p303
      %s305 = ssub.s32 %s40, %s52
      %p306 = scmp.eq.s32.totalorder %s305, 0
      %s308 = sadd.s32 %s307, 1
      %s309 = scalar_select %p306, %s307, %s308
      %p312 = pneg %p306
      %p313 = scmp.eq.s32.totalorder %s33, 1
      %p314 = por %p312, %p313
      %p315 = scmp.ne.s32.totalorder %s307, %s310
      %p316 = scmp.eq.s32.totalorder %s33, 0
      %p317 = por %p315, %p316
      %p318 = scmp.ne.s32.totalorder %s307, %s310
      %p319 = scmp.eq.s32.totalorder %s38, 1
      %p320 = por %p318, %p319
      %p321 = scmp.ne.s32.totalorder %s310, %s311
      %p322 = scmp.eq.s32.totalorder %s38, 0
      %p323 = por %p321, %p322
      %p324 = scmp.ne.s32.totalorder %s310, %s311
      %p325 = scmp.eq.s32.totalorder %s39, 1
      %p326 = por %p324, %p325
      %p328 = scmp.ne.s32.totalorder %s311, %s327
      %p329 = scmp.eq.s32.totalorder %s39, 0
      %p330 = por %p328, %p329
      %p331 = scmp.le.s32.totalorder 1, %s33
      %p332 = scmp.lt.s32.totalorder %s33, 3
      %p333 = pnand %p331, %p332
      %p334 = pneg %p333
      // Predicated region
      $region9: #{tpu_custom_call.1} parent=5 // pred_check
        _
      $region10: #{tpu_custom_call.1} parent=5 // pred_check_branch
        %336 = sbr.rel (%p333) target = $region12
      $region11: #{tpu_custom_call.1} parent=5 // pred_region
        %s337 = ssub.s32 %s33, 1
        // Predicated region
        $region13: #{tpu_custom_call.1} parent=11 // pred_check
          %p338 = pneg %p130
        $region14: #{tpu_custom_call.1} parent=11 // pred_check_branch
          %340 = sbr.rel (%p338) target = $region16
        $region15: #{tpu_custom_call.1} parent=11 // pred_region
          %342 = vsyncadd [#allocation6], 0
          %s343 = sshll.u32 %s2, 4
          %s344 = int_to_ptr.hbm [resolvable:$true] %s343
          %s345 = sshll.u32 [#allocation7], 4
          %s346 = int_to_ptr.vmem [resolvable:$true] %s345
          %351 = dma.hbm_to_vmem [thread:$0]  %s344, 1024, %s346, [#allocation6], 64, 64, 4
        $region16: #{tpu_custom_call.1} parent=11 // pred_fallthru
          _
        // Predicated region
        $region17: #{tpu_custom_call.1} parent=11 // pred_check
          %p352 = pneg %p151
        $region18: #{tpu_custom_call.1} parent=11 // pred_check_branch
          %354 = sbr.rel (%p352) target = $region20
        $region19: #{tpu_custom_call.1} parent=11 // pred_region
          %356 = vsyncadd [#allocation9], 0
          %s357 = sshll.u32 %s3, 4
          %s358 = int_to_ptr.hbm [resolvable:$true] %s357
          %s359 = sshll.u32 [#allocation8], 4
          %s360 = int_to_ptr.vmem [resolvable:$true] %s359
          %365 = dma.hbm_to_vmem [thread:$0]  %s358, 256, %s360, [#allocation9], 128, 128, 8
        $region20: #{tpu_custom_call.1} parent=11 // pred_fallthru
          _
        // Predicated region
        $region21: #{tpu_custom_call.1} parent=11 // pred_check
          %p366 = pneg %p172
        $region22: #{tpu_custom_call.1} parent=11 // pred_check_branch
          %368 = sbr.rel (%p366) target = $region24
        $region23: #{tpu_custom_call.1} parent=11 // pred_region
          %370 = vsyncadd [#allocation9], 0
          %s371 = sshll.u32 %s4, 4
          %s372 = int_to_ptr.hbm [resolvable:$true] %s371
          %s373 = sshll.u32 [#allocation10], 4
          %s374 = int_to_ptr.vmem [resolvable:$true] %s373
          %379 = dma.hbm_to_vmem [thread:$0]  %s372, 256, %s374, [#allocation9], 128, 128, 8
        $region24: #{tpu_custom_call.1} parent=11 // pred_fallthru
          _
        // Predicated region
        $region25: #{tpu_custom_call.1} parent=11 // pred_check
          %p380 = pneg %p193
        $region26: #{tpu_custom_call.1} parent=11 // pred_check_branch
          %382 = sbr.rel (%p380) target = $region28
        $region27: #{tpu_custom_call.1} parent=11 // pred_region
          _
        $region28: #{tpu_custom_call.1} parent=11 // pred_fallthru
          _
      $region12: #{tpu_custom_call.1} parent=5 // pred_fallthru
        _
      %p383 = scmp.lt.s32.totalorder %s33, 2
      // Predicated region
      $region29: #{tpu_custom_call.1} parent=5 // pred_check
        %p384 = pneg %p383
      $region30: #{tpu_custom_call.1} parent=5 // pred_check_branch
        %386 = sbr.rel (%p384) target = $region32
      $region31: #{tpu_custom_call.1} parent=5 // pred_region
        // Predicated region
        $region33: #{tpu_custom_call.1} parent=31 // pred_check
          %p387 = pneg %p71
        $region34: #{tpu_custom_call.1} parent=31 // pred_check_branch
          %389 = sbr.rel (%p387) target = $region36
        $region35: #{tpu_custom_call.1} parent=31 // pred_region
          %s390 = sand.u32 %s61, 1
          %s391 = scalar_lea.sflag [#allocation3], %s390
          %s392 = sand.u32 %s61, 1
          %s393 = smul.addr %s392, 8
          %s394 = scalar_lea.vmem [#allocation2], %s393
          %s395 = sadd.s32 %s40, %s41
          %p396 = scmp.lt.s32.totalorder %s395, 0
          %s397 = scalar_select %p396, %s395, 0
          %399 = vsyncadd %s391, 0
          %s400 = smul.addr %s397, 8
          %s401 = scalar_lea.hbm %s0, %s400
          %s403 = sshll.u32 %s401, 4
          %s404 = int_to_ptr.hbm [resolvable:$true] %s403
          %s405 = sshll.u32 %s394, 4
          %s406 = int_to_ptr.vmem [resolvable:$true] %s405
          %408 = dma.hbm_to_vmem [thread:$0]  %s404, 128, %s406, %s391
        $region36: #{tpu_custom_call.1} parent=31 // pred_fallthru
          _
        // Predicated region
        $region37: #{tpu_custom_call.1} parent=31 // pred_check
          %p409 = pneg %p103
        $region38: #{tpu_custom_call.1} parent=31 // pred_check_branch
          %411 = sbr.rel (%p409) target = $region40
        $region39: #{tpu_custom_call.1} parent=31 // pred_region
          %s412 = sand.u32 %s33, 1
          %s413 = scalar_lea.sflag [#allocation6], %s412
          %s414 = sand.u32 %s93, 1
          %s415 = smul.addr %s414, 8
          %s416 = scalar_lea.vmem [#allocation5], %s415
          %s417 = sadd.s32 %s40, %s41
          %p418 = scmp.lt.s32.totalorder %s417, 0
          %s419 = scalar_select %p418, %s417, 0
          %421 = vsyncadd %s413, 0
          %s422 = smul.addr %s419, 8
          %s423 = scalar_lea.hbm %s1, %s422
          %s425 = sshll.u32 %s423, 4
          %s426 = int_to_ptr.hbm [resolvable:$true] %s425
          %s427 = sshll.u32 %s416, 4
          %s428 = int_to_ptr.vmem [resolvable:$true] %s427
          %430 = dma.hbm_to_vmem [thread:$0]  %s426, 128, %s428, %s413
        $region40: #{tpu_custom_call.1} parent=31 // pred_fallthru
          _
      $region32: #{tpu_custom_call.1} parent=5 // pred_fallthru
        _
      %p431 = scmp.le.s32.totalorder 1, %s33
      %p432 = scmp.lt.s32.totalorder %s33, 3
      %p433 = pnand %p431, %p432
      %p434 = pneg %p433
      // Predicated region
      $region41: #{tpu_custom_call.1} parent=5 // pred_check
        _
      $region42: #{tpu_custom_call.1} parent=5 // pred_check_branch
        %436 = sbr.rel (%p433) target = $region44
      $region43: #{tpu_custom_call.1} parent=5 // pred_region
        %s437 = ssub.s32 %s33, 1
        %s438 = sand.u32 %s64, 1
        %s439 = scalar_lea.sflag [#allocation3], %s438
        %s440 = sand.u32 %s64, 1
        %s441 = smul.addr %s440, 8
        %s442 = scalar_lea.vmem [#allocation2], %s441
        // Predicated region
        $region45: #{tpu_custom_call.1} parent=43 // pred_check
          %p443 = pneg %p77
        $region46: #{tpu_custom_call.1} parent=43 // pred_check_branch
          %445 = sbr.rel (%p443) target = $region48
        $region47: #{tpu_custom_call.1} parent=43 // pred_region
          %447 = dma.done %s439, 128
        $region48: #{tpu_custom_call.1} parent=43 // pred_fallthru
          _
        %s448 = sand.u32 %s38, 1
        %s449 = scalar_lea.sflag [#allocation6], %s448
        %s450 = sand.u32 %s96, 1
        %s451 = smul.addr %s450, 8
        %s452 = scalar_lea.vmem [#allocation5], %s451
        // Predicated region
        $region49: #{tpu_custom_call.1} parent=43 // pred_check
          %p453 = pneg %p109
        $region50: #{tpu_custom_call.1} parent=43 // pred_check_branch
          %455 = sbr.rel (%p453) target = $region52
        $region51: #{tpu_custom_call.1} parent=43 // pred_region
          %457 = dma.done %s449, 128
        $region52: #{tpu_custom_call.1} parent=43 // pred_fallthru
          _
        // Predicated region
        $region53: #{tpu_custom_call.1} parent=43 // pred_check
          %p458 = pneg %p130
        $region54: #{tpu_custom_call.1} parent=43 // pred_check_branch
          %460 = sbr.rel (%p458) target = $region56
        $region55: #{tpu_custom_call.1} parent=43 // pred_region
          %462 = dma.done [#allocation6], 1024
        $region56: #{tpu_custom_call.1} parent=43 // pred_fallthru
          _
        // Predicated region
        $region57: #{tpu_custom_call.1} parent=43 // pred_check
          %p463 = pneg %p151
        $region58: #{tpu_custom_call.1} parent=43 // pred_check_branch
          %465 = sbr.rel (%p463) target = $region60
        $region59: #{tpu_custom_call.1} parent=43 // pred_region
          %467 = dma.done [#allocation9], 256
        $region60: #{tpu_custom_call.1} parent=43 // pred_fallthru
          _
        // Predicated region
        $region61: #{tpu_custom_call.1} parent=43 // pred_check
          %p468 = pneg %p172
        $region62: #{tpu_custom_call.1} parent=43 // pred_check_branch
          %470 = sbr.rel (%p468) target = $region64
        $region63: #{tpu_custom_call.1} parent=43 // pred_region
          %472 = dma.done [#allocation9], 256
        $region64: #{tpu_custom_call.1} parent=43 // pred_fallthru
          _
        %s473 = sand.u32 %s64, 1
        %s474 = scalar_lea.sflag [#allocation3], %s473
        %s475 = sand.u32 %s64, 1
        %s476 = smul.addr %s475, 8
        %s477 = scalar_lea.vmem [#allocation2], %s476
        %p478 = pneg %p77
        %p479 = pneg %p74
        %s480 = sand.u32 %s38, 1
        %s481 = scalar_lea.sflag [#allocation6], %s480
        %s482 = sand.u32 %s96, 1
        %s483 = smul.addr %s482, 8
        %s484 = scalar_lea.vmem [#allocation5], %s483
        %p485 = pneg %p109
        %p486 = pneg %p106
        %p487 = pneg %p130
        %p488 = pneg %p127
        %p489 = pneg %p151
        %p490 = pneg %p148
        %p491 = pneg %p172
        %p492 = pneg %p169
        %p493 = pneg %p193
        %p494 = pneg %p190
        %p495 = pneg %p219
        %p496 = pneg %p216
        %s497 = sand.u32 %s206, 1
        %s498 = scalar_lea.sflag [#allocation4], %s497
        %s499 = sand.u32 %s206, 1
        %s500 = smul.addr %s499, 8
        %s501 = scalar_lea.vmem [#allocation11], %s500
        %p502 = pneg %p245
        %p503 = pneg %p242
        %s504 = sand.u32 %s38, 1
        %s505 = scalar_lea.sflag [#allocation13], %s504
        %s506 = sand.u32 %s232, 1
        %s507 = smul.addr %s506, 8
        %s508 = scalar_lea.vmem [#allocation12], %s507
        %p509 = pneg %p271
        %p510 = pneg %p268
        %s511 = sand.u32 %s38, 1
        %s512 = scalar_lea.sflag [#allocation13], %s511
        %s513 = sand.u32 %s258, 1
        %s514 = smul.addr %s513, 8
        %s515 = scalar_lea.vmem [#allocation14], %s514
        %p516 = pneg %p297
        %p517 = pneg %p294
        %s518 = sand.u32 %s38, 1
        %s519 = scalar_lea.sflag [#allocation16], %s518
        %s520 = sand.u32 %s284, 1
        %s521 = smul.addr %s520, 8
        %s522 = scalar_lea.vmem [#allocation15], %s521
        %p523 = pneg %p323
        %p524 = pneg %p320
        %s525 = sand.u32 %s38, 1
        %s526 = scalar_lea.sflag [#allocation16], %s525
        %s527 = sand.u32 %s310, 1
        %s528 = smul.addr %s527, 8
        %s529 = scalar_lea.vmem [#allocation17], %s528
        %s530 = sadd.s32 %s42, %s43
        %p531 = scmp.lt.s32.totalorder %s530, 0
        %s532 = scalar_select %p531, %s530, 0
        %s533 = sadd.s32 %s42, %s43
        %p534 = scmp.lt.s32.totalorder %s533, 0
        %s535 = scalar_select %p534, %s533, 0
        %p536 = scmp.eq.s32.totalorder %s43, 0
        // Predicated region
        $region65: #{tpu_custom_call.1} parent=43 // pred_check
          %p537 = pneg %p536
        $region66: #{tpu_custom_call.1} parent=43 // pred_check_branch
          %539 = sbr.rel (%p537) target = $region68
        $region67: #{tpu_custom_call.1} parent=43 // pred_region
          %540 = vst [vmem:[%s501] sm:$0xff] 0.0
          %541 = vst [vmem:[%s508] sm:$0xff] 0.0
          %542 = vst [vmem:[%s515] sm:$0xff] 0.0
          %543 = vst [vmem:[%s522] sm:$0xff] 0.0
          %544 = vst [vmem:[%s529] sm:$0xff] 0.0
        $region68: #{tpu_custom_call.1} parent=43 // pred_fallthru
          _
        %p545 = scmp.eq.s32.totalorder %s42, 0
        %p546 = pnand %p545, %p536
        %p547 = pneg %p546
        // Predicated region
        $region69: #{tpu_custom_call.1} parent=43 // pred_check
          _
        $region70: #{tpu_custom_call.1} parent=43 // pred_check_branch
          %549 = sbr.rel (%p546) target = $region72
        $region71: #{tpu_custom_call.1} parent=43 // pred_region
          %v550 = vld [vmem:[#allocation8] sm:$0xff]
          %v551 = vld [vmem:[#allocation8 + $0x8] sm:$0xff]
          %v552 = vld [vmem:[#allocation10] sm:$0xff]
          %v553 = vld [vmem:[#allocation10 + $0x8] sm:$0xff]
          %v554 = vld [vmem:[%s5] sm:$0x1]
          %v555 = vlaneseq
          %v556 = vand.u32 %v555, 127
          %vm557 = vcmask 130048
          %v558 = vsel %vm557, %v550, -inf
          %559 = vmax.xlane.f32.xlu0 %v558
          %v560 = vpop.xlane.xlu0 %559
          %v561 = vsel %vm557, %v551, -inf
          %562 = vmax.xlane.f32.xlu0 %v561
          %v563 = vpop.xlane.xlu0 %562
          %vm564 = vcmp.eq.f32.partialorder %v550, %v560
          %vm565 = vcmp.eq.f32.partialorder %v551, %v563
          %v566 = vsel %vm564, %v556, 16
          %v567 = vsel %vm565, %v556, 16
          %v568 = vsel %vm557, %v566, 2147483647
          %v569 = vand.u32 %v568, 65535
          %v570 = vshra.s32 %v568, 16
          %v571 = vcvt.s32.f32 %v569
          %v572 = vcvt.s32.f32 %v570
          %573 = vmin.xlane.f32.xlu0 %v572
          %v574 = vpop.xlane.xlu0 %573
          %vm575 = vcmp.eq.f32.partialorder %v572, %v574
          %v576 = vsel %vm575, %v571, inf
          %577 = vmin.xlane.f32.xlu0 %v576
          %v578 = vpop.xlane.xlu0 %577
          %v579 = vcvt.f32.s32 %v578
          %v580 = vcvt.f32.s32 %v574
          %v581 = vshll.u32 %v580, 16
          %v582 = vadd.s32 %v581, %v579
          %v583 = vsel %vm557, %v567, 2147483647
          %v584 = vand.u32 %v583, 65535
          %v585 = vshra.s32 %v583, 16
          %v586 = vcvt.s32.f32 %v584
          %v587 = vcvt.s32.f32 %v585
          %588 = vmin.xlane.f32.xlu0 %v587
          %v589 = vpop.xlane.xlu0 %588
          %vm590 = vcmp.eq.f32.partialorder %v587, %v589
          %v591 = vsel %vm590, %v586, inf
          %592 = vmin.xlane.f32.xlu0 %v591
          %v593 = vpop.xlane.xlu0 %592
          %v594 = vcvt.f32.s32 %v593
          %v595 = vcvt.f32.s32 %v589
          %v596 = vshll.u32 %v595, 16
          %v597 = vadd.s32 %v596, %v594
          %vm598 = vcmp.eq.s32.totalorder %v556, %v582
          %vm599 = vcmp.eq.s32.totalorder %v556, %v597
          %v600 = vsel %vm598, 1, 0
          %v601 = vsel %vm599, 1, 0
          %v602 = vcvt.s32.f32 %v600
          %v603 = vcvt.s32.f32 %v601
          %v604 = vsel %vm557, %v552, -inf
          %605 = vmax.xlane.f32.xlu0 %v604
          %v606 = vpop.xlane.xlu0 %605
          %v607 = vsel %vm557, %v553, -inf
          %608 = vmax.xlane.f32.xlu0 %v607
          %v609 = vpop.xlane.xlu0 %608
          %vm610 = vcmp.eq.f32.partialorder %v552, %v606
          %vm611 = vcmp.eq.f32.partialorder %v553, %v609
          %v612 = vsel %vm610, %v556, 16
          %v613 = vsel %vm611, %v556, 16
          %v614 = vsel %vm557, %v612, 2147483647
          %v615 = vand.u32 %v614, 65535
          %v616 = vshra.s32 %v614, 16
          %v617 = vcvt.s32.f32 %v615
          %v618 = vcvt.s32.f32 %v616
          %619 = vmin.xlane.f32.xlu0 %v618
          %v620 = vpop.xlane.xlu0 %619
          %vm621 = vcmp.eq.f32.partialorder %v618, %v620
          %v622 = vsel %vm621, %v617, inf
          %623 = vmin.xlane.f32.xlu0 %v622
          %v624 = vpop.xlane.xlu0 %623
          %v625 = vcvt.f32.s32 %v624
          %v626 = vcvt.f32.s32 %v620
          %v627 = vshll.u32 %v626, 16
          %v628 = vadd.s32 %v627, %v625
          %v629 = vsel %vm557, %v613, 2147483647
          %v630 = vand.u32 %v629, 65535
          %v631 = vshra.s32 %v629, 16
          %v632 = vcvt.s32.f32 %v630
          %v633 = vcvt.s32.f32 %v631
          %634 = vmin.xlane.f32.xlu0 %v633
          %v635 = vpop.xlane.xlu0 %634
          %vm636 = vcmp.eq.f32.partialorder %v633, %v635
          %v637 = vsel %vm636, %v632, inf
          %638 = vmin.xlane.f32.xlu0 %v637
          %v639 = vpop.xlane.xlu0 %638
          %v640 = vcvt.f32.s32 %v639
          %v641 = vcvt.f32.s32 %v635
          %v642 = vshll.u32 %v641, 16
          %v643 = vadd.s32 %v642, %v640
          %vm644 = vcmp.eq.s32.totalorder %v556, %v628
          %vm645 = vcmp.eq.s32.totalorder %v556, %v643
          %v646 = vsel %vm644, 1, 0
          %v647 = vsel %vm645, 1, 0
          %v648 = vcvt.s32.f32 %v646
          %v649 = vcvt.s32.f32 %v647
          %v650 = vsub.f32 %v602, %v648
          %v651 = vsub.f32 %v603, %v649
          %v653 = vperm.slane %v554, 0
          %v655 = vmul.f32 %v650, %v653
          %v656 = vmul.f32 %v651, %v653
          %v657 = vsel %vm557, %v655, 0.0
          %658 = vadd.xlane.f32.xlu0 %v657
          %v659 = vpop.xlane.xlu0 %658
          %v660 = vsel %vm557, %v656, 0.0
          %661 = vadd.xlane.f32.xlu0 %v660
          %v662 = vpop.xlane.xlu0 %661
          %v663 = vrot.slane %v659, 4
          %v664 = vadd.f32 %v659, %v663
          %v665 = vrot.slane %v664, 2
          %v666 = vadd.f32 %v664, %v665
          %v667 = vrot.slane %v666, 1
          %v668 = vadd.f32 %v666, %v667
          %v669 = vrot.slane %v662, 4
          %v670 = vadd.f32 %v662, %v669
          %v671 = vrot.slane %v670, 2
          %v672 = vadd.f32 %v670, %v671
          %v673 = vrot.slane %v672, 1
          %v674 = vadd.f32 %v672, %v673
          %v675 = vld [vmem:[%s529] sm:$0xff]
          %v676 = vand.u32 2147483647, %v668
          %v677 = vand.u32 2147483647, %v674
          %vm678 = vcmask 0
          %v679 = vsel %vm678, %v676, 0.0
          %v680 = vsel %vm678, %v677, 0.0
          %v681 = vadd.f32 %v679, %v680
          %682 = vadd.xlane.f32.xlu0 %v681
          %v683 = vpop.xlane.xlu0 %682
          %v684 = vrot.slane %v683, 4
          %v685 = vadd.f32 %v683, %v684
          %v686 = vrot.slane %v685, 2
          %v687 = vadd.f32 %v685, %v686
          %v688 = vrot.slane %v687, 1
          %v689 = vadd.f32 %v687, %v688
          %s690 = vtos %v689
          %v691 = vstv %s690
          %v692 = vadd.f32 %v675, %v691
          %693 = vst [vmem:[%s529] sm:$0xff] %v692
          %vm694 = vcmp.ne.f32.partialorder %v552, 0.0
          %vm695 = vcmp.ne.f32.partialorder %v553, 0.0
          %v696 = vsel %vm694, 1.0, 0.0
          %v697 = vsel %vm695, 1.0, 0.0
          %v698 = vsel %vm557, %v696, -inf
          %699 = vmax.xlane.f32.xlu0 %v698
          %v700 = vpop.xlane.xlu0 %699
          %v701 = vsel %vm557, %v697, -inf
          %702 = vmax.xlane.f32.xlu0 %v701
          %v703 = vpop.xlane.xlu0 %702
          %vm704 = vcmp.gt.f32.partialorder %v700, 0.0
          %vm705 = vcmp.gt.f32.partialorder %v703, 0.0
          %v706 = vmul.f32 %v550, %v648
          %v707 = vmul.f32 %v551, %v649
          %v708 = vsel %vm557, %v706, 0.0
          %709 = vadd.xlane.f32.xlu0 %v708
          %v710 = vpop.xlane.xlu0 %709
          %v711 = vsel %vm557, %v707, 0.0
          %712 = vadd.xlane.f32.xlu0 %v711
          %v713 = vpop.xlane.xlu0 %712
          %v714 = vsub.f32 %v550, %v560
          %v715 = vsub.f32 %v551, %v563
          %v716 = vmul.f32 %v714, 1.442695
          %v717 = vpow.pop %v716
          %v718 = vmul.f32 %v715, 1.442695
          %v719 = vpow.pop %v718
          %v720 = vsel %vm557, %v717, 0.0
          %721 = vadd.xlane.f32.xlu0 %v720
          %v722 = vpop.xlane.xlu0 %721
          %v723 = vsel %vm557, %v719, 0.0
          %724 = vadd.xlane.f32.xlu0 %v723
          %v725 = vpop.xlane.xlu0 %724
          %v726 = vlog2.pop %v722
          %v727 = vmul.f32 %v726, 0.6931472
          %v728 = vlog2.pop %v725
          %v729 = vmul.f32 %v728, 0.6931472
          %v730 = vadd.f32 %v560, %v727
          %v731 = vadd.f32 %v563, %v729
          %v732 = vsub.f32 %v730, %v710
          %v733 = vsub.f32 %v731, %v713
          %v734 = vsel %vm704, %v732, 0.0
          %v735 = vsel %vm705, %v733, 0.0
          %v736 = vld [vmem:[%s515] sm:$0xff]
          %vm737 = vcmask 7168
          %v738 = vsel %vm737, %v734, 0.0
          %v739 = vsel %vm737, %v735, 0.0
          %v740 = vadd.f32 %v738, %v739
          %741 = vadd.xlane.f32.xlu0 %v740
          %v742 = vpop.xlane.xlu0 %741
          %v743 = vrot.slane %v742, 4
          %v744 = vadd.f32 %v742, %v743
          %v745 = vrot.slane %v744, 2
          %v746 = vadd.f32 %v744, %v745
          %v747 = vrot.slane %v746, 1
          %v748 = vadd.f32 %v746, %v747
          %s749 = vtos %v748
          %v750 = vstv %s749
          %v751 = vadd.f32 %v736, %v750
          %752 = vst [vmem:[%s515] sm:$0xff] %v751
          %v753 = vld [vmem:[%s522] sm:$0xff]
          %v754 = vsel %vm704, 1, 0
          %v755 = vsel %vm705, 1, 0
          %v756 = vcvt.s32.f32 %v754
          %v757 = vcvt.s32.f32 %v755
          %v758 = vsel %vm737, %v756, 0.0
          %v759 = vsel %vm737, %v757, 0.0
          %v760 = vadd.f32 %v758, %v759
          %761 = vadd.xlane.f32.xlu0 %v760
          %v762 = vpop.xlane.xlu0 %761
          %v763 = vrot.slane %v762, 4
          %v764 = vadd.f32 %v762, %v763
          %v765 = vrot.slane %v764, 2
          %v766 = vadd.f32 %v764, %v765
          %v767 = vrot.slane %v766, 1
          %v768 = vadd.f32 %v766, %v767
          %s769 = vtos %v768
          %v770 = vstv %s769
          %v771 = vadd.f32 %v753, %v770
          %772 = vst [vmem:[%s522] sm:$0xff] %v771
        $region72: #{tpu_custom_call.1} parent=43 // pred_fallthru
          _
        %v773 = vld [vmem:[%s442] sm:$0xff]
        %v774 = vld [vmem:[%s452] sm:$0xff]
        %v775 = vlaneseq
        %v776 = vand.u32 %v775, 127
        %vm777 = vcmp.lt.s32.totalorder %v776, 0
        %v778 = vsub.s32 0, %v776
        %v779 = vsel %vm777, %v778, %v776
        %v780 = vshrl.u32 %v779, 3
        %v781 = vand.u32 %v779, 7
        %v782 = vsub.s32 0, %v781
        %v783 = vsel %vm777, %v782, %v781
        %vm784 = vcmp.ne.s32.totalorder %v783, 0
        %vm785 = vcmp.lt.s32.totalorder %v783, 0
        %vm786 = vmand %vm785, %vm784
        %v787 = vadd.s32 %v783, 8
        %v788 = vsel %vm786, %v787, %v783
        %789 = vrot.lane.b32.xlu0 %v773, 127
        %v790 = vpop.permute.xlu0 %789
        %791 = vrot.lane.b32.xlu0 %v773, 1
        %v792 = vpop.permute.xlu0 %791
        %vm793 = vcmp.lt.s32.totalorder %v788, 7
        %v794 = vsel %vm793, 1, 0
        %vm795 = vcmp.eq.s32.totalorder %v794, 1
        %v796 = vsel %vm795, %v790, -inf
        %v797 = vmax.f32 %v773, %v796
        %vm798 = vcmp.ge.s32.totalorder %v788, 1
        %v799 = vsel %vm798, 1, 0
        %vm800 = vcmp.eq.s32.totalorder %v799, 1
        %v801 = vsel %vm800, %v792, -inf
        %v802 = vmax.f32 %v797, %v801
        %803 = vrot.lane.b32.xlu0 %v802, 126
        %v804 = vpop.permute.xlu0 %803
        %805 = vrot.lane.b32.xlu0 %v802, 2
        %v806 = vpop.permute.xlu0 %805
        %vm807 = vcmp.lt.s32.totalorder %v788, 6
        %v808 = vsel %vm807, 1, 0
        %vm809 = vcmp.eq.s32.totalorder %v808, 1
        %v810 = vsel %vm809, %v804, -inf
        %v811 = vmax.f32 %v802, %v810
        %vm812 = vcmp.ge.s32.totalorder %v788, 2
        %v813 = vsel %vm812, 1, 0
        %vm814 = vcmp.eq.s32.totalorder %v813, 1
        %v815 = vsel %vm814, %v806, -inf
        %v816 = vmax.f32 %v811, %v815
        %817 = vrot.lane.b32.xlu0 %v816, 124
        %v818 = vpop.permute.xlu0 %817
        %819 = vrot.lane.b32.xlu0 %v816, 4
        %v820 = vpop.permute.xlu0 %819
        %vm821 = vcmp.lt.s32.totalorder %v788, 4
        %v822 = vsel %vm821, 1, 0
        %vm823 = vcmp.eq.s32.totalorder %v822, 1
        %v824 = vsel %vm823, %v818, -inf
        %v825 = vmax.f32 %v816, %v824
        %vm826 = vcmp.ge.s32.totalorder %v788, 4
        %v827 = vsel %vm826, 1, 0
        %vm828 = vcmp.eq.s32.totalorder %v827, 1
        %v829 = vsel %vm828, %v820, -inf
        %v830 = vmax.f32 %v825, %v829
        %v831 = vsub.f32 %v773, %v830
        %v832 = vmul.f32 %v831, 1.442695
        %v833 = vpow.pop %v832
        %834 = vrot.lane.b32.xlu0 %v833, 1
        %v835 = vpop.permute.xlu0 %834
        %v836 = vsel %vm800, %v835, 0.0
        %v837 = vadd.f32 %v833, %v836
        %838 = vrot.lane.b32.xlu0 %v833, 127
        %v839 = vpop.permute.xlu0 %838
        %v840 = vsel %vm795, %v839, 0.0
        %v841 = vadd.f32 %v833, %v840
        %842 = vrot.lane.b32.xlu0 %v837, 2
        %v843 = vpop.permute.xlu0 %842
        %v844 = vsel %vm814, %v843, 0.0
        %v845 = vadd.f32 %v837, %v844
        %846 = vrot.lane.b32.xlu0 %v841, 126
        %v847 = vpop.permute.xlu0 %846
        %v848 = vsel %vm809, %v847, 0.0
        %v849 = vadd.f32 %v841, %v848
        %850 = vrot.lane.b32.xlu0 %v845, 4
        %v851 = vpop.permute.xlu0 %850
        %v852 = vsel %vm828, %v851, 0.0
        %v853 = vadd.f32 %v845, %v852
        %854 = vrot.lane.b32.xlu0 %v849, 124
        %v855 = vpop.permute.xlu0 %854
        %v856 = vsel %vm823, %v855, 0.0
        %v857 = vadd.f32 %v849, %v856
        %v858 = vadd.f32 %v853, %v857
        %v859 = vsub.f32 %v858, %v833
        %vm860 = vcmp.ne.f32.partialorder %v774, 0.0
        %v861 = vsel %vm860, 1.0, 0.0
        %v862 = vpack.c.bf16 %v861, %v861
        %v863 = vld [vmem:[#allocation7] sm:$0xf]
        %v864 = vld [vmem:[#allocation7 + $0x4] sm:$0xf]
        %v865 = vld [vmem:[#allocation7 + $0x8] sm:$0xf]
        %v866 = vld [vmem:[#allocation7 + $0xc] sm:$0xf]
        %v867 = vld [vmem:[#allocation7 + $0x10] sm:$0xf]
        %v868 = vld [vmem:[#allocation7 + $0x14] sm:$0xf]
        %v869 = vld [vmem:[#allocation7 + $0x18] sm:$0xf]
        %v870 = vld [vmem:[#allocation7 + $0x1c] sm:$0xf]
        %v871 = vld [vmem:[#allocation7 + $0x20] sm:$0xf]
        %v872 = vld [vmem:[#allocation7 + $0x24] sm:$0xf]
        %v873 = vld [vmem:[#allocation7 + $0x28] sm:$0xf]
        %v874 = vld [vmem:[#allocation7 + $0x2c] sm:$0xf]
        %v875 = vld [vmem:[#allocation7 + $0x30] sm:$0xf]
        %v876 = vld [vmem:[#allocation7 + $0x34] sm:$0xf]
        %v877 = vld [vmem:[#allocation7 + $0x38] sm:$0xf]
        %v878 = vld [vmem:[#allocation7 + $0x3c] sm:$0xf]
        %v895 = vunpack.c.l.b16 %v863
        %v896 = vunpack.c.l.b16 %v864
        %v897 = vunpack.c.l.b16 %v865
        %v898 = vunpack.c.l.b16 %v866
        %v899 = vunpack.c.l.b16 %v867
        %v900 = vunpack.c.l.b16 %v868
        %v901 = vunpack.c.l.b16 %v869
        %v902 = vunpack.c.l.b16 %v870
        %v903 = vunpack.c.l.b16 %v871
        %v904 = vunpack.c.l.b16 %v872
        %v905 = vunpack.c.l.b16 %v873
        %v906 = vunpack.c.l.b16 %v874
        %v907 = vunpack.c.l.b16 %v875
        %v908 = vunpack.c.l.b16 %v876
        %v909 = vunpack.c.l.b16 %v877
        %v910 = vunpack.c.l.b16 %v878
        %v911 = vpack.c.b16 %v896, %v895
        %v912 = vpack.c.b16 %v898, %v897
        %v913 = vpack.c.b16 %v900, %v899
        %v914 = vpack.c.b16 %v902, %v901
        %v915 = vpack.c.b16 %v904, %v903
        %v916 = vpack.c.b16 %v906, %v905
        %v917 = vpack.c.b16 %v908, %v907
        %v918 = vpack.c.b16 %v910, %v909
        %927 = vmatpush.bf16.msra.mxu0 %v918
        %928 = vmatpush.bf16.msra.mxu0 %v917
        %929 = vmatpush.bf16.msra.mxu0 %v916
        %930 = vmatpush.bf16.msra.mxu0 %v915
        %931 = vmatpush.bf16.msra.mxu0 %v914
        %932 = vmatpush.bf16.msra.mxu0 %v913
        %933 = vmatpush.bf16.msra.mxu0 %v912
        %934 = vmatpush.bf16.msra.mxu0 %v911
        %935 = vmatmul.bf16.gmra.mxu0 %v862
        %v936 = vpop.f32.mrf.mxu0
        %v937 = vadd.f32 0.0, %v936
        %v938 = vpop.f32.mrf.mxu0
        %939 = vdwg.mxu0
        %s940 = sadd.s32 %s42, %s43
        %s941 = smul.u32 %s940, 8
        %v942 = vlaneseq
        %v943 = vshrl.u32 %v942, 7
        %v944 = vstv %s941
        %v945 = vadd.s32 %v944, %v943
        %vm946 = vcmp.gt.f32.partialorder %v937, 0.5
        %vm947 = vcmp.lt.s32.totalorder %v945, 8
        %v948 = vsel %vm947, 1, 0
        %vm949 = vcmp.eq.s32.totalorder %v948, 1
        %vm950 = vmand %vm946, %vm949
        %v951 = vlog2.pop %v859
        %v952 = vmul.f32 %v951, 0.6931472
        %v953 = vadd.f32 %v830, %v952
        %v954 = vmul.f32 %v953, 0.125
        %v955 = vmul.f32 %v773, %v774
        %v956 = vsub.f32 %v954, %v955
        %v957 = vsel %vm950, %v956, 0.0
        %v958 = vsel %vm950, 0.125, 0.0
        %v959 = vld [vmem:[%s501] sm:$0xff]
        %v960 = vadd.f32 %v959, %v957
        %961 = vst [vmem:[%s501] sm:$0xff] %v960
        %v962 = vld [vmem:[%s508] sm:$0xff]
        %v963 = vadd.f32 %v962, %v958
        %964 = vst [vmem:[%s508] sm:$0xff] %v963
        %s965 = sand.u32 %s206, 1
        %s966 = scalar_lea.sflag [#allocation4], %s965
        %s967 = sand.u32 %s206, 1
        %s968 = smul.addr %s967, 8
        %s969 = scalar_lea.vmem [#allocation11], %s968
        %s970 = sand.u32 %s38, 1
        %s971 = scalar_lea.sflag [#allocation13], %s970
        %s972 = sand.u32 %s232, 1
        %s973 = smul.addr %s972, 8
        %s974 = scalar_lea.vmem [#allocation12], %s973
        %s975 = sand.u32 %s38, 1
        %s976 = scalar_lea.sflag [#allocation13], %s975
        %s977 = sand.u32 %s258, 1
        %s978 = smul.addr %s977, 8
        %s979 = scalar_lea.vmem [#allocation14], %s978
        %s980 = sand.u32 %s38, 1
        %s981 = scalar_lea.sflag [#allocation16], %s980
        %s982 = sand.u32 %s284, 1
        %s983 = smul.addr %s982, 8
        %s984 = scalar_lea.vmem [#allocation15], %s983
        %s985 = sand.u32 %s38, 1
        %s986 = scalar_lea.sflag [#allocation16], %s985
        %s987 = sand.u32 %s310, 1
        %s988 = smul.addr %s987, 8
        %s989 = scalar_lea.vmem [#allocation17], %s988
        // Predicated region
        $region73: #{tpu_custom_call.1} parent=43 // pred_check
          %p990 = pneg %p216
        $region74: #{tpu_custom_call.1} parent=43 // pred_check_branch
          %992 = sbr.rel (%p990) target = $region76
        $region75: #{tpu_custom_call.1} parent=43 // pred_region
          %994 = vsyncadd %s966, 0
          %s995 = smul.addr %s42, 8
          %s996 = scalar_lea.hbm %s6, %s995
          %s998 = sshll.u32 %s969, 4
          %s999 = int_to_ptr.vmem [resolvable:$true] %s998
          %s1000 = sshll.u32 %s996, 4
          %s1001 = int_to_ptr.hbm [resolvable:$true] %s1000
          %1003 = dma.vmem_to_hbm [thread:$0]  %s999, 128, %s1001, %s966
        $region76: #{tpu_custom_call.1} parent=43 // pred_fallthru
          _
        // Predicated region
        $region77: #{tpu_custom_call.1} parent=43 // pred_check
          %p1004 = pneg %p242
        $region78: #{tpu_custom_call.1} parent=43 // pred_check_branch
          %1006 = sbr.rel (%p1004) target = $region80
        $region79: #{tpu_custom_call.1} parent=43 // pred_region
          %1008 = vsyncadd %s971, 0
          %s1009 = smul.addr %s42, 8
          %s1010 = scalar_lea.hbm %s7, %s1009
          %s1012 = sshll.u32 %s974, 4
          %s1013 = int_to_ptr.vmem [resolvable:$true] %s1012
          %s1014 = sshll.u32 %s1010, 4
          %s1015 = int_to_ptr.hbm [resolvable:$true] %s1014
          %1017 = dma.vmem_to_hbm [thread:$0]  %s1013, 128, %s1015, %s971
        $region80: #{tpu_custom_call.1} parent=43 // pred_fallthru
          _
        // Predicated region
        $region81: #{tpu_custom_call.1} parent=43 // pred_check
          %p1018 = pneg %p268
        $region82: #{tpu_custom_call.1} parent=43 // pred_check_branch
          %1020 = sbr.rel (%p1018) target = $region84
        $region83: #{tpu_custom_call.1} parent=43 // pred_region
          %1022 = vsyncadd %s976, 0
          %s1023 = smul.addr %s42, 8
          %s1024 = scalar_lea.hbm %s8, %s1023
          %s1026 = sshll.u32 %s979, 4
          %s1027 = int_to_ptr.vmem [resolvable:$true] %s1026
          %s1028 = sshll.u32 %s1024, 4
          %s1029 = int_to_ptr.hbm [resolvable:$true] %s1028
          %1031 = dma.vmem_to_hbm [thread:$0]  %s1027, 128, %s1029, %s976
        $region84: #{tpu_custom_call.1} parent=43 // pred_fallthru
          _
        // Predicated region
        $region85: #{tpu_custom_call.1} parent=43 // pred_check
          %p1032 = pneg %p294
        $region86: #{tpu_custom_call.1} parent=43 // pred_check_branch
          %1034 = sbr.rel (%p1032) target = $region88
        $region87: #{tpu_custom_call.1} parent=43 // pred_region
          %1036 = vsyncadd %s981, 0
          %s1037 = smul.addr %s42, 8
          %s1038 = scalar_lea.hbm %s9, %s1037
          %s1040 = sshll.u32 %s984, 4
          %s1041 = int_to_ptr.vmem [resolvable:$true] %s1040
          %s1042 = sshll.u32 %s1038, 4
          %s1043 = int_to_ptr.hbm [resolvable:$true] %s1042
          %1045 = dma.vmem_to_hbm [thread:$0]  %s1041, 128, %s1043, %s981
        $region88: #{tpu_custom_call.1} parent=43 // pred_fallthru
          _
        // Predicated region
        $region89: #{tpu_custom_call.1} parent=43 // pred_check
          %p1046 = pneg %p320
        $region90: #{tpu_custom_call.1} parent=43 // pred_check_branch
          %1048 = sbr.rel (%p1046) target = $region92
        $region91: #{tpu_custom_call.1} parent=43 // pred_region
          %1050 = vsyncadd %s986, 0
          %s1051 = smul.addr %s42, 8
          %s1052 = scalar_lea.hbm %s10, %s1051
          %s1054 = sshll.u32 %s989, 4
          %s1055 = int_to_ptr.vmem [resolvable:$true] %s1054
          %s1056 = sshll.u32 %s1052, 4
          %s1057 = int_to_ptr.hbm [resolvable:$true] %s1056
          %1059 = dma.vmem_to_hbm [thread:$0]  %s1055, 128, %s1057, %s986
        $region92: #{tpu_custom_call.1} parent=43 // pred_fallthru
          _
      $region44: #{tpu_custom_call.1} parent=5 // pred_fallthru
        _
      %p1060 = scmp.le.s32.totalorder 2, %s33
      // Predicated region
      $region93: #{tpu_custom_call.1} parent=5 // pred_check
        %p1061 = pneg %p1060
      $region94: #{tpu_custom_call.1} parent=5 // pred_check_branch
        %1063 = sbr.rel (%p1061) target = $region96
      $region95: #{tpu_custom_call.1} parent=5 // pred_region
        %s1064 = ssub.s32 %s33, 2
        // Predicated region
        $region97: #{tpu_custom_call.1} parent=95 // pred_check
          %p1065 = pneg %p222
        $region98: #{tpu_custom_call.1} parent=95 // pred_check_branch
          %1067 = sbr.rel (%p1065) target = $region100
        $region99: #{tpu_custom_call.1} parent=95 // pred_region
          %s1068 = sand.u32 %s207, 1
          %s1069 = scalar_lea.sflag [#allocation4], %s1068
          %s1070 = sand.u32 %s207, 1
          %s1071 = smul.addr %s1070, 8
          %s1072 = scalar_lea.vmem [#allocation11], %s1071
          %1074 = dma.done %s1069, 128
        $region100: #{tpu_custom_call.1} parent=95 // pred_fallthru
          _
        // Predicated region
        $region101: #{tpu_custom_call.1} parent=95 // pred_check
          %p1075 = pneg %p248
        $region102: #{tpu_custom_call.1} parent=95 // pred_check_branch
          %1077 = sbr.rel (%p1075) target = $region104
        $region103: #{tpu_custom_call.1} parent=95 // pred_region
          %s1078 = sand.u32 %s39, 1
          %s1079 = scalar_lea.sflag [#allocation13], %s1078
          %s1080 = sand.u32 %s233, 1
          %s1081 = smul.addr %s1080, 8
          %s1082 = scalar_lea.vmem [#allocation12], %s1081
          %1084 = dma.done %s1079, 128
        $region104: #{tpu_custom_call.1} parent=95 // pred_fallthru
          _
        // Predicated region
        $region105: #{tpu_custom_call.1} parent=95 // pred_check
          %p1085 = pneg %p274
        $region106: #{tpu_custom_call.1} parent=95 // pred_check_branch
          %1087 = sbr.rel (%p1085) target = $region108
        $region107: #{tpu_custom_call.1} parent=95 // pred_region
          %s1088 = sand.u32 %s39, 1
          %s1089 = scalar_lea.sflag [#allocation13], %s1088
          %s1090 = sand.u32 %s259, 1
          %s1091 = smul.addr %s1090, 8
          %s1092 = scalar_lea.vmem [#allocation14], %s1091
          %1094 = dma.done %s1089, 128
        $region108: #{tpu_custom_call.1} parent=95 // pred_fallthru
          _
        // Predicated region
        $region109: #{tpu_custom_call.1} parent=95 // pred_check
          %p1095 = pneg %p300
        $region110: #{tpu_custom_call.1} parent=95 // pred_check_branch
          %1097 = sbr.rel (%p1095) target = $region112
        $region111: #{tpu_custom_call.1} parent=95 // pred_region
          %s1098 = sand.u32 %s39, 1
          %s1099 = scalar_lea.sflag [#allocation16], %s1098
          %s1100 = sand.u32 %s285, 1
          %s1101 = smul.addr %s1100, 8
          %s1102 = scalar_lea.vmem [#allocation15], %s1101
          %1104 = dma.done %s1099, 128
        $region112: #{tpu_custom_call.1} parent=95 // pred_fallthru
          _
        // Predicated region
        $region113: #{tpu_custom_call.1} parent=95 // pred_check
          %p1105 = pneg %p326
        $region114: #{tpu_custom_call.1} parent=95 // pred_check_branch
          %1107 = sbr.rel (%p1105) target = $region116
        $region115: #{tpu_custom_call.1} parent=95 // pred_region
          %s1108 = sand.u32 %s39, 1
          %s1109 = scalar_lea.sflag [#allocation16], %s1108
          %s1110 = sand.u32 %s311, 1
          %s1111 = smul.addr %s1110, 8
          %s1112 = scalar_lea.vmem [#allocation17], %s1111
          %1114 = dma.done %s1109, 128
        $region116: #{tpu_custom_call.1} parent=95 // pred_fallthru
          _
      $region96: #{tpu_custom_call.1} parent=5 // pred_fallthru
        _
    $region6: #{tpu_custom_call.1} parent=1 // loop_footer
      %s37 = sadd.s32 1, %s33
    $region7: #{tpu_custom_call.1} parent=1 // loop_footer_branch
      %32 = sbr.rel target = $region3
    $region8: #{tpu_custom_call.1} parent=1 // loop_exit
      _
    %1115 = vsyncpa [#allocation3], 1
    %s1116 = scalar_lea.sflag [#allocation3], 1
    %1117 = vsyncpa %s1116, 1
    %1118 = vsyncpa [#allocation6], 1
    %s1119 = scalar_lea.sflag [#allocation6], 1
    %1120 = vsyncpa %s1119, 1
    %1121 = vsyncpa [#allocation9], 1
    %1122 = vsyncpa [#allocation4], 1
    %s1123 = scalar_lea.sflag [#allocation4], 1
    %1124 = vsyncpa %s1123, 1
    %1125 = vsyncpa [#allocation13], 1
    %s1126 = scalar_lea.sflag [#allocation13], 1
    %1127 = vsyncpa %s1126, 1
    %1128 = vsyncpa [#allocation16], 1
    %s1129 = scalar_lea.sflag [#allocation16], 1
    %1130 = vsyncpa %s1129, 1

</llo_original>
